<compile_context>
chip_gen: v6e
topology: v6e:2x2x1
jax: 0.10.0
libtpu: 0.0.40
codegen_flags: <defaults>
</compile_context>

<pallas_src>
import jax
import jax.numpy as jnp
from jax.experimental import pallas as pl
from jax.experimental.pallas import tpu as pltpu


def _round_up(x, m):
    return ((x + m - 1) // m) * m


def _nbytes(a):
    return int(a.size) * a.dtype.itemsize


def init_hetero_rgcn_params(key, relations, node_in_dims, hidden_dim, num_layers):
    """Per-layer, per-relation Linear(-1, hidden) parameters (lazy Linear:
    in_features = current feature dim of the relation's source node type)."""
    params = []
    dims = dict(node_in_dims)
    for _ in range(num_layers):
        layer_params = {}
        for rel in relations:
            src, _, _ = rel
            f_in = dims[src]
            key, kw, kb = jax.random.split(key, 3)
            bound = 1.0 / (f_in ** 0.5)
            w = jax.random.uniform(kw, (f_in, hidden_dim), jnp.float32, -bound, bound)
            b = jax.random.uniform(kb, (1, hidden_dim), jnp.float32, -bound, bound)
            layer_params[rel] = (w, b)
        params.append(layer_params)
        dims = {nt: hidden_dim for nt in dims}  # every dst type now carries hidden_dim
    return params


def hetero_rgcn_forward(params, x_dict, adj_dict, relations, hidden_dim):
    """Whole HeteroRGCN forward (all layers, all relations) in one pallas_call."""
    type_names = sorted(x_dict.keys())
    t_idx = {nt: i for i, nt in enumerate(type_names)}
    T, L = len(type_names), len(params)
    n_nodes = {nt: x_dict[nt].shape[0] for nt in type_names}

    # Group relations by SOURCE type: contiguous column blocks in the packed
    # weights so each group becomes one wide MXU matmul reusing the X operand.
    by_src = {}
    for rel in relations:
        by_src.setdefault(rel[0], []).append(rel)
    ordered_rels, groups = [], []
    for src_nt, rels in by_src.items():
        start = len(ordered_rels)
        ordered_rels.extend(rels)
        groups.append((t_idx[src_nt], tuple(range(start, start + len(rels)))))
    R = len(ordered_rels)
    rel_dst = tuple(t_idx[d] for (_, _, d) in ordered_rels)
    dst_type_ids = tuple(sorted({t_idx[d] for (_, _, d) in relations}))

    # Pad node count AND feature/hidden dim to full 128-wide tiles: NP is both
    # the M of X@W and the contraction K of A@H; DP gives lane-dense stores.
    NP = _round_up(max(n_nodes.values()), 128)
    DP = _round_up(max([x.shape[1] for x in x_dict.values()] + [hidden_dim]), 128)

    # ---- pack + pad inputs (zero padding keeps the math exact) -------------
    # Node features go in as bf16 once; activations stay bf16 between layers.
    x_pad = jnp.zeros((T, NP, DP), jnp.float32)
    for nt in type_names:
        x = x_dict[nt]
        x_pad = x_pad.at[t_idx[nt], : x.shape[0], : x.shape[1]].set(x)
    x_pad = x_pad.astype(jnp.bfloat16)

    # Dense adjacencies (dst x src); small integer edge counts -> exact in bf16.
    adj_pad = jnp.zeros((R, NP, NP), jnp.float32)
    for r, rel in enumerate(ordered_rels):
        a = adj_dict[rel]
        adj_pad = adj_pad.at[r, : a.shape[0], : a.shape[1]].set(a)
    adj_pad = adj_pad.astype(jnp.bfloat16)

    # Weights: one (DP, R*DP) slab per layer; relation r occupies columns
    # [r*DP, (r+1)*DP), so same-source relations form a contiguous wide block.
    # Biases: dense 2-D (L, R*DP) tile with the same column layout.
    w_pad = jnp.zeros((L, DP, R * DP), jnp.float32)
    b_pad = jnp.zeros((L, R * DP), jnp.float32)
    for l, layer_params in enumerate(params):
        for r, rel in enumerate(ordered_rels):
            w, b = layer_params[rel]
            w_pad = w_pad.at[l, : w.shape[0], r * DP : r * DP + w.shape[1]].set(w)
            b_pad = b_pad.at[l, r * DP : r * DP + b.shape[1]].set(b[0])
    w_pad = w_pad.astype(jnp.bfloat16)

    n_act = 0 if L == 1 else min(2, L - 1)  # bf16 ping-pong activation buffers

    def kernel(x_ref, adj_ref, w_ref, b_ref, o_ref, *acts):
        # Everything is VMEM-resident; (layer, group, relation) loops unroll.
        for l in range(L):
            read = x_ref if l == 0 else acts[(l - 1) % 2]
            write = o_ref if l == L - 1 else acts[l % 2]

            acc = {}  # dst type -> local f32 accumulator (lives in vregs)
            for s, rel_ids in groups:
                # After layer 0 only destination types still carry features
                # (PyTorch's HeteroConv would KeyError here; we skip == zeros).
                if l > 0 and s not in dst_type_ids:
                    continue
                xs = read[s]                                     # bf16 (NP, DP)
                g0, k = rel_ids[0], len(rel_ids)
                wg = w_ref[l, :, g0 * DP : (g0 + k) * DP]        # bf16 (DP, k*DP)
                bg = b_ref[l : l + 1, g0 * DP : (g0 + k) * DP]   # f32  (1, k*DP)
                # One wide MXU pass for all relations sharing this source;
                # bias-add / ReLU in f32 (VPU fast path), cast to bf16 once.
                h = jnp.dot(xs, wg, preferred_element_type=jnp.float32)
                h = jnp.maximum(h + bg, 0.0).astype(jnp.bfloat16)
                for j, r in enumerate(rel_ids):
                    d = rel_dst[r]
                    # Edge sum-aggregation as dense-adjacency matmul;
                    # cross-relation sum stays in vregs (no VMEM RMW).
                    m = jnp.dot(adj_ref[r], h[:, j * DP : (j + 1) * DP],
                                preferred_element_type=jnp.float32)
                    acc[d] = m if d not in acc else acc[d] + m
            # One store per destination type (bf16 inter-layer, f32 final).
            for d, v in acc.items():
                write[d] = v.astype(write.dtype)
            for d in dst_type_ids:  # safety: never leave a dst block undefined
                if d not in acc:
                    write[d] = jnp.zeros((NP, DP), write.dtype)

    # Explicit scoped-VMEM limit sized from the actual resident footprint.
    bytes_in = _nbytes(x_pad) + _nbytes(adj_pad) + _nbytes(w_pad) + _nbytes(b_pad)
    bytes_out = T * NP * DP * 4
    bytes_scratch = n_act * T * NP * DP * 2
    vmem_limit = int(min(120 * 2 ** 20,
                         2 * (bytes_in + bytes_out + bytes_scratch) + (4 << 20)))

    out_pad = pl.pallas_call(
        kernel,
        out_shape=jax.ShapeDtypeStruct((T, NP, DP), jnp.float32),
        in_specs=[
            pl.BlockSpec((T, NP, DP), lambda: (0, 0, 0)),
            pl.BlockSpec((R, NP, NP), lambda: (0, 0, 0)),
            pl.BlockSpec((L, DP, R * DP), lambda: (0, 0, 0)),
            pl.BlockSpec((L, R * DP), lambda: (0, 0)),
        ],
        out_specs=pl.BlockSpec((T, NP, DP), lambda: (0, 0, 0)),
        scratch_shapes=[pltpu.VMEM((T, NP, DP), jnp.bfloat16) for _ in range(n_act)],
        compiler_params=pltpu.CompilerParams(vmem_limit_bytes=vmem_limit),
    )(x_pad, adj_pad, w_pad, b_pad)

    # HeteroConv returns only destination node types.
    dst_types = {d for (_, _, d) in relations}
    return {nt: out_pad[t_idx[nt], : n_nodes[nt], :hidden_dim]
            for nt in type_names if nt in dst_types}


def _dense_adj(edge_index, n_src, n_dst):
    """edge_index: (2, E) with [src_row; dst_row] -> dense (n_dst, n_src) adjacency.
    Multi-edges accumulate, matching scatter-sum message aggregation."""
    src, dst = edge_index
    return jnp.zeros((n_dst, n_src), jnp.float32).at[dst, src].add(1.0)


if __name__ == "__main__":
    key = jax.random.PRNGKey(0)

    hidden_dim = 32
    num_layers = 2
    node_types = {"author": (16, 16), "paper": (32, 32)}  # type -> (num_nodes, in_feat)
    relations = [
        ("author", "writes", "paper"),
        ("paper", "written_by", "author"),
        ("paper", "cites", "paper"),
    ]
    num_edges = 64

    # node features
    x_dict = {}
    for nt, (n, f) in node_types.items():
        key, k = jax.random.split(key)
        x_dict[nt] = jax.random.normal(k, (n, f), jnp.float32)

    # edge_index_dict -> dense adjacency per relation (scatter-sum becomes a matmul)
    adj_dict = {}
    for rel in relations:
        src_t, _, dst_t = rel
        n_src, n_dst = node_types[src_t][0], node_types[dst_t][0]
        key, ks, kd = jax.random.split(key, 3)
        src_idx = jax.random.randint(ks, (num_edges,), 0, n_src)
        dst_idx = jax.random.randint(kd, (num_edges,), 0, n_dst)
        adj_dict[rel] = _dense_adj(jnp.stack([src_idx, dst_idx]), n_src, n_dst)

    params = init_hetero_rgcn_params(
        jax.random.PRNGKey(42),
        relations,
        {nt: f for nt, (_, f) in node_types.items()},
        hidden_dim,
        num_layers,
    )

    out_dict = hetero_rgcn_forward(params, x_dict, adj_dict, relations, hidden_dim)
    out_dict = jax.tree_util.tree_map(jax.block_until_ready, out_dict)

    assert out_dict["paper"].shape == (node_types["paper"][0], hidden_dim)
    assert out_dict["author"].shape == (node_types["author"][0], hidden_dim)

    # Reference in plain JAX at MATCHING precision (bf16 MXU operands, f32
    # accumulation, bf16 inter-layer activations).
    def ref_forward(params, x_dict, adj_dict, relations):
        feats = {nt: v.astype(jnp.bfloat16) for nt, v in x_dict.items()}
        num_l = len(params)
        for l, layer_params in enumerate(params):
            out = {}
            for rel in relations:
                w, b = layer_params[rel]
                s, _, d = rel
                h = jnp.dot(feats[s], w.astype(jnp.bfloat16),
                            preferred_element_type=jnp.float32)
                h = jnp.maximum(h + b, 0.0).astype(jnp.bfloat16)
                m = jnp.dot(adj_dict[rel].astype(jnp.bfloat16), h,
                            preferred_element_type=jnp.float32)
                out[d] = m if d not in out else out[d] + m
            if l == num_l - 1:
                feats = out
            else:
                feats = {nt: v.astype(jnp.bfloat16) for nt, v in out.items()}
        return feats

    ref = ref_forward(params, x_dict, adj_dict, relations)
    for nt in out_dict:
        assert jnp.allclose(out_dict[nt], ref[nt], atol=1e-2, rtol=1e-2), nt

    print("KERNEL_OK")
</pallas_src>

<mosaic_0001>
module attributes {stable_mosaic.version = 11 : i64} {
  func.func @kernel(%arg0: memref<2x128x128xbf16, #tpu.memory_space<vmem>>, %arg1: memref<3x128x128xbf16, #tpu.memory_space<vmem>>, %arg2: memref<2x128x384xbf16, #tpu.memory_space<vmem>>, %arg3: memref<2x384xf32, #tpu.memory_space<vmem>>, %arg4: memref<2x128x128xf32, #tpu.memory_space<vmem>>, %arg5: memref<2x128x128xbf16, #tpu.memory_space<vmem>>) attributes {dimension_semantics = [], scalar_prefetch = 0 : i64, scratch_operands = 1 : i64, tpu.core_type = #tpu.core_type<tc>} {
    %c0 = arith.constant 0 : index
    %c0_0 = arith.constant 0 : index
    %c0_1 = arith.constant 0 : index
    %0 = vector.load %arg0[%c0, %c0_0, %c0_1] : memref<2x128x128xbf16, #tpu.memory_space<vmem>>, vector<1x128x128xbf16>
    %1 = vector.shape_cast %0 : vector<1x128x128xbf16> to vector<128x128xbf16>
    %c0_2 = arith.constant 0 : index
    %c0_3 = arith.constant 0 : index
    %c0_4 = arith.constant 0 : index
    %2 = vector.load %arg2[%c0_2, %c0_3, %c0_4] : memref<2x128x384xbf16, #tpu.memory_space<vmem>>, vector<1x128x128xbf16>
    %3 = vector.shape_cast %2 : vector<1x128x128xbf16> to vector<128x128xbf16>
    %c0_5 = arith.constant 0 : index
    %c0_6 = arith.constant 0 : index
    %4 = vector.load %arg3[%c0_5, %c0_6] : memref<2x384xf32, #tpu.memory_space<vmem>>, vector<1x128xf32>
    %cst = arith.constant dense<0.000000e+00> : vector<128x128xf32>
    %5 = tpu.matmul %1, %3, %cst {dimension_numbers = #tpu.dot_dimension_numbers<[1], [0], [0], [1], [0, 0, 1, 1], [], []>} : vector<128x128xbf16>, vector<128x128xbf16>, vector<128x128xf32> -> vector<128x128xf32>
    %6 = vector.broadcast %4 : vector<1x128xf32> to vector<128x128xf32>
    %7 = arith.addf %5, %6 : vector<128x128xf32>
    %cst_7 = arith.constant 0.000000e+00 : f32
    %8 = vector.broadcast %cst_7 : f32 to vector<128x128xf32>
    %9 = arith.maximumf %7, %8 : vector<128x128xf32>
    %10 = arith.truncf %9 : vector<128x128xf32> to vector<128x128xbf16>
    %c0_8 = arith.constant 0 : index
    %c0_9 = arith.constant 0 : index
    %c0_10 = arith.constant 0 : index
    %11 = vector.load %arg1[%c0_8, %c0_9, %c0_10] : memref<3x128x128xbf16, #tpu.memory_space<vmem>>, vector<1x128x128xbf16>
    %12 = vector.shape_cast %11 : vector<1x128x128xbf16> to vector<128x128xbf16>
    %cst_11 = arith.constant dense<0.000000e+00> : vector<128x128xf32>
    %13 = tpu.matmul %12, %10, %cst_11 {dimension_numbers = #tpu.dot_dimension_numbers<[1], [0], [0], [1], [0, 0, 1, 1], [], []>} : vector<128x128xbf16>, vector<128x128xbf16>, vector<128x128xf32> -> vector<128x128xf32>
    %c1 = arith.constant 1 : index
    %c0_12 = arith.constant 0 : index
    %c0_13 = arith.constant 0 : index
    %14 = vector.load %arg0[%c1, %c0_12, %c0_13] : memref<2x128x128xbf16, #tpu.memory_space<vmem>>, vector<1x128x128xbf16>
    %15 = vector.shape_cast %14 : vector<1x128x128xbf16> to vector<128x128xbf16>
    %c0_14 = arith.constant 0 : index
    %c0_15 = arith.constant 0 : index
    %c128 = arith.constant 128 : index
    %16 = vector.load %arg2[%c0_14, %c0_15, %c128] : memref<2x128x384xbf16, #tpu.memory_space<vmem>>, vector<1x128x256xbf16>
    %17 = vector.shape_cast %16 : vector<1x128x256xbf16> to vector<128x256xbf16>
    %c0_16 = arith.constant 0 : index
    %c128_17 = arith.constant 128 : index
    %18 = vector.load %arg3[%c0_16, %c128_17] : memref<2x384xf32, #tpu.memory_space<vmem>>, vector<1x256xf32>
    %cst_18 = arith.constant dense<0.000000e+00> : vector<128x256xf32>
    %19 = tpu.matmul %15, %17, %cst_18 {dimension_numbers = #tpu.dot_dimension_numbers<[1], [0], [0], [1], [0, 0, 1, 1], [], []>} : vector<128x128xbf16>, vector<128x256xbf16>, vector<128x256xf32> -> vector<128x256xf32>
    %20 = vector.broadcast %18 : vector<1x256xf32> to vector<128x256xf32>
    %21 = arith.addf %19, %20 : vector<128x256xf32>
    %cst_19 = arith.constant 0.000000e+00 : f32
    %22 = vector.broadcast %cst_19 : f32 to vector<128x256xf32>
    %23 = arith.maximumf %21, %22 : vector<128x256xf32>
    %24 = arith.truncf %23 : vector<128x256xf32> to vector<128x256xbf16>
    %c1_20 = arith.constant 1 : index
    %c0_21 = arith.constant 0 : index
    %c0_22 = arith.constant 0 : index
    %25 = vector.load %arg1[%c1_20, %c0_21, %c0_22] : memref<3x128x128xbf16, #tpu.memory_space<vmem>>, vector<1x128x128xbf16>
    %26 = vector.shape_cast %25 : vector<1x128x128xbf16> to vector<128x128xbf16>
    %27 = vector.extract_strided_slice %24 {offsets = [0, 0], sizes = [128, 128], strides = [1, 1]} : vector<128x256xbf16> to vector<128x128xbf16>
    %cst_23 = arith.constant dense<0.000000e+00> : vector<128x128xf32>
    %28 = tpu.matmul %26, %27, %cst_23 {dimension_numbers = #tpu.dot_dimension_numbers<[1], [0], [0], [1], [0, 0, 1, 1], [], []>} : vector<128x128xbf16>, vector<128x128xbf16>, vector<128x128xf32> -> vector<128x128xf32>
    %c2 = arith.constant 2 : index
    %c0_24 = arith.constant 0 : index
    %c0_25 = arith.constant 0 : index
    %29 = vector.load %arg1[%c2, %c0_24, %c0_25] : memref<3x128x128xbf16, #tpu.memory_space<vmem>>, vector<1x128x128xbf16>
    %30 = vector.shape_cast %29 : vector<1x128x128xbf16> to vector<128x128xbf16>
    %31 = vector.extract_strided_slice %24 {offsets = [0, 128], sizes = [128, 128], strides = [1, 1]} : vector<128x256xbf16> to vector<128x128xbf16>
    %cst_26 = arith.constant dense<0.000000e+00> : vector<128x128xf32>
    %32 = tpu.matmul %30, %31, %cst_26 {dimension_numbers = #tpu.dot_dimension_numbers<[1], [0], [0], [1], [0, 0, 1, 1], [], []>} : vector<128x128xbf16>, vector<128x128xbf16>, vector<128x128xf32> -> vector<128x128xf32>
    %33 = arith.addf %13, %32 : vector<128x128xf32>
    %34 = arith.truncf %33 : vector<128x128xf32> to vector<128x128xbf16>
    %c1_27 = arith.constant 1 : index
    %c0_28 = arith.constant 0 : index
    %c0_29 = arith.constant 0 : index
    %35 = vector.load %arg5[%c1_27, %c0_28, %c0_29] : memref<2x128x128xbf16, #tpu.memory_space<vmem>>, vector<1x128x128xbf16>
    %36 = vector.shape_cast %35 : vector<1x128x128xbf16> to vector<128x128xbf16>
    %37 = vector.shape_cast %34 : vector<128x128xbf16> to vector<1x128x128xbf16>
    tpu.vector_store %arg5[%c1_27, %c0_28, %c0_29], %37 {strides = array<i32>} : memref<2x128x128xbf16, #tpu.memory_space<vmem>>, vector<1x128x128xbf16>,
    %38 = arith.truncf %28 : vector<128x128xf32> to vector<128x128xbf16>
    %c0_30 = arith.constant 0 : index
    %c0_31 = arith.constant 0 : index
    %c0_32 = arith.constant 0 : index
    %39 = vector.load %arg5[%c0_30, %c0_31, %c0_32] : memref<2x128x128xbf16, #tpu.memory_space<vmem>>, vector<1x128x128xbf16>
    %40 = vector.shape_cast %39 : vector<1x128x128xbf16> to vector<128x128xbf16>
    %41 = vector.shape_cast %38 : vector<128x128xbf16> to vector<1x128x128xbf16>
    tpu.vector_store %arg5[%c0_30, %c0_31, %c0_32], %41 {strides = array<i32>} : memref<2x128x128xbf16, #tpu.memory_space<vmem>>, vector<1x128x128xbf16>,
    %c0_33 = arith.constant 0 : index
    %c0_34 = arith.constant 0 : index
    %c0_35 = arith.constant 0 : index
    %42 = vector.load %arg5[%c0_33, %c0_34, %c0_35] : memref<2x128x128xbf16, #tpu.memory_space<vmem>>, vector<1x128x128xbf16>
    %43 = vector.shape_cast %42 : vector<1x128x128xbf16> to vector<128x128xbf16>
    %c1_36 = arith.constant 1 : index
    %c0_37 = arith.constant 0 : index
    %c0_38 = arith.constant 0 : index
    %44 = vector.load %arg2[%c1_36, %c0_37, %c0_38] : memref<2x128x384xbf16, #tpu.memory_space<vmem>>, vector<1x128x128xbf16>
    %45 = vector.shape_cast %44 : vector<1x128x128xbf16> to vector<128x128xbf16>
    %c1_39 = arith.constant 1 : index
    %c0_40 = arith.constant 0 : index
    %46 = vector.load %arg3[%c1_39, %c0_40] : memref<2x384xf32, #tpu.memory_space<vmem>>, vector<1x128xf32>
    %cst_41 = arith.constant dense<0.000000e+00> : vector<128x128xf32>
    %47 = tpu.matmul %43, %45, %cst_41 {dimension_numbers = #tpu.dot_dimension_numbers<[1], [0], [0], [1], [0, 0, 1, 1], [], []>} : vector<128x128xbf16>, vector<128x128xbf16>, vector<128x128xf32> -> vector<128x128xf32>
    %48 = vector.broadcast %46 : vector<1x128xf32> to vector<128x128xf32>
    %49 = arith.addf %47, %48 : vector<128x128xf32>
    %cst_42 = arith.constant 0.000000e+00 : f32
    %50 = vector.broadcast %cst_42 : f32 to vector<128x128xf32>
    %51 = arith.maximumf %49, %50 : vector<128x128xf32>
    %52 = arith.truncf %51 : vector<128x128xf32> to vector<128x128xbf16>
    %c0_43 = arith.constant 0 : index
    %c0_44 = arith.constant 0 : index
    %c0_45 = arith.constant 0 : index
    %53 = vector.load %arg1[%c0_43, %c0_44, %c0_45] : memref<3x128x128xbf16, #tpu.memory_space<vmem>>, vector<1x128x128xbf16>
    %54 = vector.shape_cast %53 : vector<1x128x128xbf16> to vector<128x128xbf16>
    %cst_46 = arith.constant dense<0.000000e+00> : vector<128x128xf32>
    %55 = tpu.matmul %54, %52, %cst_46 {dimension_numbers = #tpu.dot_dimension_numbers<[1], [0], [0], [1], [0, 0, 1, 1], [], []>} : vector<128x128xbf16>, vector<128x128xbf16>, vector<128x128xf32> -> vector<128x128xf32>
    %c1_47 = arith.constant 1 : index
    %c0_48 = arith.constant 0 : index
    %c0_49 = arith.constant 0 : index
    %56 = vector.load %arg5[%c1_47, %c0_48, %c0_49] : memref<2x128x128xbf16, #tpu.memory_space<vmem>>, vector<1x128x128xbf16>
    %57 = vector.shape_cast %56 : vector<1x128x128xbf16> to vector<128x128xbf16>
    %c1_50 = arith.constant 1 : index
    %c0_51 = arith.constant 0 : index
    %c128_52 = arith.constant 128 : index
    %58 = vector.load %arg2[%c1_50, %c0_51, %c128_52] : memref<2x128x384xbf16, #tpu.memory_space<vmem>>, vector<1x128x256xbf16>
    %59 = vector.shape_cast %58 : vector<1x128x256xbf16> to vector<128x256xbf16>
    %c1_53 = arith.constant 1 : index
    %c128_54 = arith.constant 128 : index
    %60 = vector.load %arg3[%c1_53, %c128_54] : memref<2x384xf32, #tpu.memory_space<vmem>>, vector<1x256xf32>
    %cst_55 = arith.constant dense<0.000000e+00> : vector<128x256xf32>
    %61 = tpu.matmul %57, %59, %cst_55 {dimension_numbers = #tpu.dot_dimension_numbers<[1], [0], [0], [1], [0, 0, 1, 1], [], []>} : vector<128x128xbf16>, vector<128x256xbf16>, vector<128x256xf32> -> vector<128x256xf32>
    %62 = vector.broadcast %60 : vector<1x256xf32> to vector<128x256xf32>
    %63 = arith.addf %61, %62 : vector<128x256xf32>
    %cst_56 = arith.constant 0.000000e+00 : f32
    %64 = vector.broadcast %cst_56 : f32 to vector<128x256xf32>
    %65 = arith.maximumf %63, %64 : vector<128x256xf32>
    %66 = arith.truncf %65 : vector<128x256xf32> to vector<128x256xbf16>
    %c1_57 = arith.constant 1 : index
    %c0_58 = arith.constant 0 : index
    %c0_59 = arith.constant 0 : index
    %67 = vector.load %arg1[%c1_57, %c0_58, %c0_59] : memref<3x128x128xbf16, #tpu.memory_space<vmem>>, vector<1x128x128xbf16>
    %68 = vector.shape_cast %67 : vector<1x128x128xbf16> to vector<128x128xbf16>
    %69 = vector.extract_strided_slice %66 {offsets = [0, 0], sizes = [128, 128], strides = [1, 1]} : vector<128x256xbf16> to vector<128x128xbf16>
    %cst_60 = arith.constant dense<0.000000e+00> : vector<128x128xf32>
    %70 = tpu.matmul %68, %69, %cst_60 {dimension_numbers = #tpu.dot_dimension_numbers<[1], [0], [0], [1], [0, 0, 1, 1], [], []>} : vector<128x128xbf16>, vector<128x128xbf16>, vector<128x128xf32> -> vector<128x128xf32>
    %c2_61 = arith.constant 2 : index
    %c0_62 = arith.constant 0 : index
    %c0_63 = arith.constant 0 : index
    %71 = vector.load %arg1[%c2_61, %c0_62, %c0_63] : memref<3x128x128xbf16, #tpu.memory_space<vmem>>, vector<1x128x128xbf16>
    %72 = vector.shape_cast %71 : vector<1x128x128xbf16> to vector<128x128xbf16>
    %73 = vector.extract_strided_slice %66 {offsets = [0, 128], sizes = [128, 128], strides = [1, 1]} : vector<128x256xbf16> to vector<128x128xbf16>
    %cst_64 = arith.constant dense<0.000000e+00> : vector<128x128xf32>
    %74 = tpu.matmul %72, %73, %cst_64 {dimension_numbers = #tpu.dot_dimension_numbers<[1], [0], [0], [1], [0, 0, 1, 1], [], []>} : vector<128x128xbf16>, vector<128x128xbf16>, vector<128x128xf32> -> vector<128x128xf32>
    %75 = arith.addf %55, %74 : vector<128x128xf32>
    %c1_65 = arith.constant 1 : index
    %c0_66 = arith.constant 0 : index
    %c0_67 = arith.constant 0 : index
    %76 = vector.load %arg4[%c1_65, %c0_66, %c0_67] : memref<2x128x128xf32, #tpu.memory_space<vmem>>, vector<1x128x128xf32>
    %77 = vector.shape_cast %76 : vector<1x128x128xf32> to vector<128x128xf32>
    %78 = vector.shape_cast %75 : vector<128x128xf32> to vector<1x128x128xf32>
    tpu.vector_store %arg4[%c1_65, %c0_66, %c0_67], %78 {strides = array<i32>} : memref<2x128x128xf32, #tpu.memory_space<vmem>>, vector<1x128x128xf32>,
    %c0_68 = arith.constant 0 : index
    %c0_69 = arith.constant 0 : index
    %c0_70 = arith.constant 0 : index
    %79 = vector.load %arg4[%c0_68, %c0_69, %c0_70] : memref<2x128x128xf32, #tpu.memory_space<vmem>>, vector<1x128x128xf32>
    %80 = vector.shape_cast %79 : vector<1x128x128xf32> to vector<128x128xf32>
    %81 = vector.shape_cast %70 : vector<128x128xf32> to vector<1x128x128xf32>
    tpu.vector_store %arg4[%c0_68, %c0_69, %c0_70], %81 {strides = array<i32>} : memref<2x128x128xf32, #tpu.memory_space<vmem>>, vector<1x128x128xf32>,
    return
  }
}

</mosaic_0001>

<llo_original>
// kernel: tpu_custom_call.1
$region0: #{tpu_custom_call.1}
  #allocation0 [shape = 'u32[]', space=smem, size = 0x4, offset = 0x4, fixed_abs, tag = 'smem constant byte address 0x4 - core index']
  #allocation1 [shape = 'u32[144,128]{1,0:T(1,128)}', space=vmem, size = 0x12000, scoped, tag = 'internal scratch']
  #allocation2 [shape = 'bf16[2,128,128]{2,1,0:T(8,128)(2,1)}', space=vmem, size = 0x10000, scoped, tag = 'scratch operand']
  %s0 = inlined_call_operand.hbm [shape: bf16[2,128,128], index: 0, kind: input, shape index: {}]
  %s1 = inlined_call_operand.hbm [shape: bf16[3,128,128], index: 1, kind: input, shape index: {}]
  %s2 = inlined_call_operand.hbm [shape: bf16[2,128,384], index: 2, kind: input, shape index: {}]
  %s3 = inlined_call_operand.hbm [shape: f32[2,384], index: 3, kind: input, shape index: {}]
  %s4 = inlined_call_operand.hbm [shape: f32[2,128,128], index: 4, kind: output, shape index: {}]
  %s5 = sld [smem:[#allocation0]]
  $region42: #{tpu_custom_call.1} parent=0
    _
  %s7 = ssub.s32 1, %s5
  %s8 = scalar_select 0, %s7, %s5
  $region1: #{tpu_custom_call.1} parent=0
    #allocation3 [shape = 'u8[65536]{0}', space=vmem, size = 0x10000, scoped, tag = 'input window, operand 0, single buffered']
    #allocation4 [shape = 's32[1]{0}', space=sflag, size = 0x4, scoped, tag = 'scoped memory for tpu_custom_call.1']
    #allocation5 [shape = 's32[1]{0}', space=sflag, size = 0x4, scoped, tag = 'scoped memory for tpu_custom_call.1']
    #allocation6 [shape = 'u8[98304]{0}', space=vmem, size = 0x18000, scoped, tag = 'input window, operand 1, single buffered']
    #allocation7 [shape = 's32[1]{0}', space=sflag, size = 0x4, scoped, tag = 'scoped memory for tpu_custom_call.1']
    #allocation8 [shape = 'u8[196608]{0}', space=vmem, size = 0x30000, scoped, tag = 'input window, operand 2, single buffered']
    #allocation9 [shape = 'u8[3072]{0}', space=vmem, size = 0xc00, scoped, tag = 'input window, operand 3, single buffered']
    #allocation10 [shape = 's32[1]{0}', space=sflag, size = 0x4, scoped, tag = 'scoped memory for tpu_custom_call.1']
    #allocation11 [shape = 'u8[131072]{0}', space=vmem, size = 0x20000, scoped, tag = 'output window, operand 0, single buffered']
    %9 = vsyncpa [#allocation4], 0
    %10 = vsyncpa [#allocation7], 0
    %11 = vsyncpa [#allocation10], 0
    %12 = vsyncpa [#allocation5], 0
    // Predicated region
    $region2: #{tpu_custom_call.1} parent=1 // pred_check
      _
    $region3: #{tpu_custom_call.1} parent=1 // pred_check_branch
      %14 = sbr.rel (0) target = $region5
    $region4: #{tpu_custom_call.1} parent=1 // pred_region
      %s16 = ssub.s32 2048, 2048
      %17 = vsyncadd [#allocation4], %s16
      %s18 = sshll.u32 [#allocation3], 4
      %s19 = int_to_ptr.vmem [resolvable:$true] %s18
      %24 = dma.hbm_to_vmem [thread:$0]  %s0, 2048, %s19, [#allocation4], 64, 64, 4
    $region5: #{tpu_custom_call.1} parent=1 // pred_fallthru
      _
    // Predicated region
    $region6: #{tpu_custom_call.1} parent=1 // pred_check
      _
    $region7: #{tpu_custom_call.1} parent=1 // pred_check_branch
      %26 = sbr.rel (0) target = $region9
    $region8: #{tpu_custom_call.1} parent=1 // pred_region
      %s28 = ssub.s32 3072, 3072
      %29 = vsyncadd [#allocation7], %s28
      %s30 = sshll.u32 [#allocation6], 4
      %s31 = int_to_ptr.vmem [resolvable:$true] %s30
      %36 = dma.hbm_to_vmem [thread:$0]  %s1, 3072, %s31, [#allocation7], 64, 64, 4
    $region9: #{tpu_custom_call.1} parent=1 // pred_fallthru
      _
    // Predicated region
    $region10: #{tpu_custom_call.1} parent=1 // pred_check
      _
    $region11: #{tpu_custom_call.1} parent=1 // pred_check_branch
      %38 = sbr.rel (0) target = $region13
    $region12: #{tpu_custom_call.1} parent=1 // pred_region
      %s40 = ssub.s32 6144, 6144
      %41 = vsyncadd [#allocation7], %s40
      %s42 = sshll.u32 [#allocation8], 4
      %s43 = int_to_ptr.vmem [resolvable:$true] %s42
      %48 = dma.hbm_to_vmem [thread:$0]  %s2, 6144, %s43, [#allocation7], 192, 192, 12
    $region13: #{tpu_custom_call.1} parent=1 // pred_fallthru
      _
    // Predicated region
    $region14: #{tpu_custom_call.1} parent=1 // pred_check
      _
    $region15: #{tpu_custom_call.1} parent=1 // pred_check_branch
      %50 = sbr.rel (0) target = $region17
    $region16: #{tpu_custom_call.1} parent=1 // pred_region
      %s52 = ssub.s32 96, 96
      %53 = vsyncadd [#allocation10], %s52
      %s55 = sshll.u32 [#allocation9], 4
      %s56 = int_to_ptr.vmem [resolvable:$true] %s55
      %58 = dma.hbm_to_vmem [thread:$0]  %s3, 96, %s56, [#allocation10]
    $region17: #{tpu_custom_call.1} parent=1 // pred_fallthru
      _
    // Predicated region
    $region18: #{tpu_custom_call.1} parent=1 // pred_check
      _
    $region19: #{tpu_custom_call.1} parent=1 // pred_check_branch
      %60 = sbr.rel (0) target = $region21
    $region20: #{tpu_custom_call.1} parent=1 // pred_region
      %61 = dma.done [#allocation4], 2048
    $region21: #{tpu_custom_call.1} parent=1 // pred_fallthru
      _
    // Predicated region
    $region22: #{tpu_custom_call.1} parent=1 // pred_check
      _
    $region23: #{tpu_custom_call.1} parent=1 // pred_check_branch
      %63 = sbr.rel (0) target = $region25
    $region24: #{tpu_custom_call.1} parent=1 // pred_region
      %64 = dma.done [#allocation7], 3072
    $region25: #{tpu_custom_call.1} parent=1 // pred_fallthru
      _
    // Predicated region
    $region26: #{tpu_custom_call.1} parent=1 // pred_check
      _
    $region27: #{tpu_custom_call.1} parent=1 // pred_check_branch
      %66 = sbr.rel (0) target = $region29
    $region28: #{tpu_custom_call.1} parent=1 // pred_region
      %67 = dma.done [#allocation7], 6144
    $region29: #{tpu_custom_call.1} parent=1 // pred_fallthru
      _
    // Predicated region
    $region30: #{tpu_custom_call.1} parent=1 // pred_check
      _
    $region31: #{tpu_custom_call.1} parent=1 // pred_check_branch
      %69 = sbr.rel (0) target = $region33
    $region32: #{tpu_custom_call.1} parent=1 // pred_region
      %70 = dma.done [#allocation10], 96
    $region33: #{tpu_custom_call.1} parent=1 // pred_fallthru
      _
    %v72 = vld [vmem:[#allocation3] sm:$0xf]
    %v73 = vld [vmem:[#allocation3 + $0x4] sm:$0xf]
    %v74 = vld [vmem:[#allocation3 + $0x8] sm:$0xf]
    %v75 = vld [vmem:[#allocation3 + $0xc] sm:$0xf]
    %v76 = vld [vmem:[#allocation3 + $0x10] sm:$0xf]
    %v77 = vld [vmem:[#allocation3 + $0x14] sm:$0xf]
    %v78 = vld [vmem:[#allocation3 + $0x18] sm:$0xf]
    %v79 = vld [vmem:[#allocation3 + $0x1c] sm:$0xf]
    %v80 = vld [vmem:[#allocation3 + $0x20] sm:$0xf]
    %v81 = vld [vmem:[#allocation3 + $0x24] sm:$0xf]
    %v82 = vld [vmem:[#allocation3 + $0x28] sm:$0xf]
    %v83 = vld [vmem:[#allocation3 + $0x2c] sm:$0xf]
    %v84 = vld [vmem:[#allocation3 + $0x30] sm:$0xf]
    %v85 = vld [vmem:[#allocation3 + $0x34] sm:$0xf]
    %v86 = vld [vmem:[#allocation3 + $0x38] sm:$0xf]
    %v87 = vld [vmem:[#allocation3 + $0x3c] sm:$0xf]
    %v88 = vld [vmem:[#allocation8] sm:$0xf]
    %v89 = vld [vmem:[#allocation8 + $0xc] sm:$0xf]
    %v90 = vld [vmem:[#allocation8 + $0x18] sm:$0xf]
    %v91 = vld [vmem:[#allocation8 + $0x24] sm:$0xf]
    %v92 = vld [vmem:[#allocation8 + $0x30] sm:$0xf]
    %v93 = vld [vmem:[#allocation8 + $0x3c] sm:$0xf]
    %v94 = vld [vmem:[#allocation8 + $0x48] sm:$0xf]
    %v95 = vld [vmem:[#allocation8 + $0x54] sm:$0xf]
    %v96 = vld [vmem:[#allocation8 + $0x60] sm:$0xf]
    %v97 = vld [vmem:[#allocation8 + $0x6c] sm:$0xf]
    %v98 = vld [vmem:[#allocation8 + $0x78] sm:$0xf]
    %v99 = vld [vmem:[#allocation8 + $0x84] sm:$0xf]
    %v100 = vld [vmem:[#allocation8 + $0x90] sm:$0xf]
    %v101 = vld [vmem:[#allocation8 + $0x9c] sm:$0xf]
    %v102 = vld [vmem:[#allocation8 + $0xa8] sm:$0xf]
    %v103 = vld [vmem:[#allocation8 + $0xb4] sm:$0xf]
    %v104 = vld [vmem:[#allocation9] sm:$0x1]
    %v105 = vlaneseq
    %v106 = vshrl.u32 %v105, 7
    %v107 = vsub.s32 0, %v106
    %v108 = vrot.slane %v104, %v107
    %v125 = vunpack.c.l.b16 %v72
    %v126 = vunpack.c.l.b16 %v73
    %v127 = vunpack.c.l.b16 %v74
    %v128 = vunpack.c.l.b16 %v75
    %v129 = vunpack.c.l.b16 %v76
    %v130 = vunpack.c.l.b16 %v77
    %v131 = vunpack.c.l.b16 %v78
    %v132 = vunpack.c.l.b16 %v79
    %v133 = vunpack.c.l.b16 %v80
    %v134 = vunpack.c.l.b16 %v81
    %v135 = vunpack.c.l.b16 %v82
    %v136 = vunpack.c.l.b16 %v83
    %v137 = vunpack.c.l.b16 %v84
    %v138 = vunpack.c.l.b16 %v85
    %v139 = vunpack.c.l.b16 %v86
    %v140 = vunpack.c.l.b16 %v87
    %v141 = vpack.c.b16 %v126, %v125
    %v142 = vpack.c.b16 %v128, %v127
    %v143 = vpack.c.b16 %v130, %v129
    %v144 = vpack.c.b16 %v132, %v131
    %v145 = vpack.c.b16 %v134, %v133
    %v146 = vpack.c.b16 %v136, %v135
    %v147 = vpack.c.b16 %v138, %v137
    %v148 = vpack.c.b16 %v140, %v139
    %v173 = vunpack.c.l.b16 %v88
    %v174 = vunpack.c.l.b16 %v89
    %v175 = vunpack.c.l.b16 %v90
    %v176 = vunpack.c.l.b16 %v91
    %v177 = vunpack.c.l.b16 %v92
    %v178 = vunpack.c.l.b16 %v93
    %v179 = vunpack.c.l.b16 %v94
    %v180 = vunpack.c.l.b16 %v95
    %v181 = vunpack.c.l.b16 %v96
    %v182 = vunpack.c.l.b16 %v97
    %v183 = vunpack.c.l.b16 %v98
    %v184 = vunpack.c.l.b16 %v99
    %v185 = vunpack.c.l.b16 %v100
    %v186 = vunpack.c.l.b16 %v101
    %v187 = vunpack.c.l.b16 %v102
    %v188 = vunpack.c.l.b16 %v103
    %v189 = vpack.c.b16 %v174, %v173
    %v190 = vpack.c.b16 %v176, %v175
    %v191 = vpack.c.b16 %v178, %v177
    %v192 = vpack.c.b16 %v180, %v179
    %v193 = vpack.c.b16 %v182, %v181
    %v194 = vpack.c.b16 %v184, %v183
    %v195 = vpack.c.b16 %v186, %v185
    %v196 = vpack.c.b16 %v188, %v187
    %205 = vmatprep.subr.bf16.mxu0 0
    %206 = vmatpush1.bf16.msra.mxu0 %v196
    %207 = vmatprep.subr.bf16.mxu0 0
    %208 = vmatpush1.bf16.msra.mxu0 %v195
    %209 = vmatprep.subr.bf16.mxu0 0
    %210 = vmatpush1.bf16.msra.mxu0 %v194
    %211 = vmatprep.subr.bf16.mxu0 0
    %212 = vmatpush1.bf16.msra.mxu0 %v193
    %213 = vmatprep.subr.bf16.mxu0 0
    %214 = vmatpush1.bf16.msra.mxu0 %v192
    %215 = vmatprep.subr.bf16.mxu0 0
    %216 = vmatpush1.bf16.msra.mxu0 %v191
    %217 = vmatprep.subr.bf16.mxu0 0
    %218 = vmatpush1.bf16.msra.mxu0 %v190
    %219 = vmatprep.subr.bf16.mxu0 0
    %220 = vmatpush1.bf16.msra.mxu0 %v189
    %221 = vmatprep.subr.bf16.mxu0 0
    %222 = vmatpush2.bf16.msra.mxu0 0
    %223 = vmatprep.subr.bf16.mxu0 0
    %224 = vmatpush2.bf16.msra.mxu0 0
    %225 = vmatprep.subr.bf16.mxu0 0
    %226 = vmatpush2.bf16.msra.mxu0 0
    %227 = vmatprep.subr.bf16.mxu0 0
    %228 = vmatpush2.bf16.msra.mxu0 0
    %229 = vmatprep.subr.bf16.mxu0 0
    %230 = vmatpush2.bf16.msra.mxu0 0
    %231 = vmatprep.subr.bf16.mxu0 0
    %232 = vmatpush2.bf16.msra.mxu0 0
    %233 = vmatprep.subr.bf16.mxu0 0
    %234 = vmatpush2.bf16.msra.mxu0 0
    %235 = vmatprep.subr.bf16.mxu0 0
    %236 = vmatpush2.bf16.msra.mxu0 0
    %237 = vmatprep.mubr.bf16.mxu0 0
    %238 = vmatmul.mubr.bf16.gmra.mxu0 %v141
    %v239 = vpop.f32.mrf.mxu0
    %v240 = vadd.f32 %v108, %v239
    %v241 = vpop.f32.mrf.mxu0
    %v242 = vpop.f32.mrf.mxu0
    %v243 = vadd.f32 %v108, %v242
    %v244 = vpop.f32.mrf.mxu0
    %245 = vmatprep.mubr.bf16.mxu0 0
    %246 = vmatmul.mubr.bf16.gmra.mxu0 %v142
    %v247 = vpop.f32.mrf.mxu0
    %v248 = vadd.f32 %v108, %v247
    %v249 = vpop.f32.mrf.mxu0
    %v250 = vpop.f32.mrf.mxu0
    %v251 = vadd.f32 %v108, %v250
    %v252 = vpop.f32.mrf.mxu0
    %253 = vmatprep.mubr.bf16.mxu0 0
    %254 = vmatmul.mubr.bf16.gmra.mxu0 %v143
    %v255 = vpop.f32.mrf.mxu0
    %v256 = vadd.f32 %v108, %v255
    %v257 = vpop.f32.mrf.mxu0
    %v258 = vpop.f32.mrf.mxu0
    %v259 = vadd.f32 %v108, %v258
    %v260 = vpop.f32.mrf.mxu0
    %261 = vmatprep.mubr.bf16.mxu0 0
    %262 = vmatmul.mubr.bf16.gmra.mxu0 %v144
    %v263 = vpop.f32.mrf.mxu0
    %v264 = vadd.f32 %v108, %v263
    %v265 = vpop.f32.mrf.mxu0
    %v266 = vpop.f32.mrf.mxu0
    %v267 = vadd.f32 %v108, %v266
    %v268 = vpop.f32.mrf.mxu0
    %269 = vmatprep.mubr.bf16.mxu0 0
    %270 = vmatmul.mubr.bf16.gmra.mxu0 %v145
    %v271 = vpop.f32.mrf.mxu0
    %v272 = vadd.f32 %v108, %v271
    %v273 = vpop.f32.mrf.mxu0
    %v274 = vpop.f32.mrf.mxu0
    %v275 = vadd.f32 %v108, %v274
    %v276 = vpop.f32.mrf.mxu0
    %277 = vmatprep.mubr.bf16.mxu0 0
    %278 = vmatmul.mubr.bf16.gmra.mxu0 %v146
    %v279 = vpop.f32.mrf.mxu0
    %v280 = vadd.f32 %v108, %v279
    %v281 = vpop.f32.mrf.mxu0
    %v282 = vpop.f32.mrf.mxu0
    %v283 = vadd.f32 %v108, %v282
    %v284 = vpop.f32.mrf.mxu0
    %285 = vmatprep.mubr.bf16.mxu0 0
    %286 = vmatmul.mubr.bf16.gmra.mxu0 %v147
    %v287 = vpop.f32.mrf.mxu0
    %v288 = vadd.f32 %v108, %v287
    %v289 = vpop.f32.mrf.mxu0
    %v290 = vpop.f32.mrf.mxu0
    %v291 = vadd.f32 %v108, %v290
    %v292 = vpop.f32.mrf.mxu0
    %293 = vmatprep.mubr.bf16.mxu0 0
    %294 = vmatmul.mubr.bf16.gmra.mxu0 %v148
    %v295 = vpop.f32.mrf.mxu0
    %v296 = vadd.f32 %v108, %v295
    %v297 = vpop.f32.mrf.mxu0
    %v298 = vpop.f32.mrf.mxu0
    %v299 = vadd.f32 %v108, %v298
    %v300 = vpop.f32.mrf.mxu0
    %301 = vdwg.mxu0
    %v302 = vmax.f32 %v240, 0.0
    %v303 = vmax.f32 %v243, 0.0
    %v304 = vmax.f32 %v248, 0.0
    %v305 = vmax.f32 %v251, 0.0
    %v306 = vmax.f32 %v256, 0.0
    %v307 = vmax.f32 %v259, 0.0
    %v308 = vmax.f32 %v264, 0.0
    %v309 = vmax.f32 %v267, 0.0
    %v310 = vmax.f32 %v272, 0.0
    %v311 = vmax.f32 %v275, 0.0
    %v312 = vmax.f32 %v280, 0.0
    %v313 = vmax.f32 %v283, 0.0
    %v314 = vmax.f32 %v288, 0.0
    %v315 = vmax.f32 %v291, 0.0
    %v316 = vmax.f32 %v296, 0.0
    %v317 = vmax.f32 %v299, 0.0
    %v318 = vpack.c.bf16 %v303, %v302
    %v319 = vpack.c.bf16 %v305, %v304
    %v320 = vpack.c.bf16 %v307, %v306
    %v321 = vpack.c.bf16 %v309, %v308
    %v322 = vpack.c.bf16 %v311, %v310
    %v323 = vpack.c.bf16 %v313, %v312
    %v324 = vpack.c.bf16 %v315, %v314
    %v325 = vpack.c.bf16 %v317, %v316
    %v326 = vld [vmem:[#allocation6] sm:$0xf]
    %v327 = vld [vmem:[#allocation6 + $0x4] sm:$0xf]
    %v328 = vld [vmem:[#allocation6 + $0x8] sm:$0xf]
    %v329 = vld [vmem:[#allocation6 + $0xc] sm:$0xf]
    %v330 = vld [vmem:[#allocation6 + $0x10] sm:$0xf]
    %v331 = vld [vmem:[#allocation6 + $0x14] sm:$0xf]
    %v332 = vld [vmem:[#allocation6 + $0x18] sm:$0xf]
    %v333 = vld [vmem:[#allocation6 + $0x1c] sm:$0xf]
    %v334 = vld [vmem:[#allocation6 + $0x20] sm:$0xf]
    %v335 = vld [vmem:[#allocation6 + $0x24] sm:$0xf]
    %v336 = vld [vmem:[#allocation6 + $0x28] sm:$0xf]
    %v337 = vld [vmem:[#allocation6 + $0x2c] sm:$0xf]
    %v338 = vld [vmem:[#allocation6 + $0x30] sm:$0xf]
    %v339 = vld [vmem:[#allocation6 + $0x34] sm:$0xf]
    %v340 = vld [vmem:[#allocation6 + $0x38] sm:$0xf]
    %v341 = vld [vmem:[#allocation6 + $0x3c] sm:$0xf]
    %s342 = scalar_lea.vmem [#allocation3], 64
    %v343 = vld [vmem:[%s342] sm:$0xf]
    %v344 = vld [vmem:[%s342 + $0x4] sm:$0xf]
    %v345 = vld [vmem:[%s342 + $0x8] sm:$0xf]
    %v346 = vld [vmem:[%s342 + $0xc] sm:$0xf]
    %v347 = vld [vmem:[%s342 + $0x10] sm:$0xf]
    %v348 = vld [vmem:[%s342 + $0x14] sm:$0xf]
    %v349 = vld [vmem:[%s342 + $0x18] sm:$0xf]
    %v350 = vld [vmem:[%s342 + $0x1c] sm:$0xf]
    %v351 = vld [vmem:[%s342 + $0x20] sm:$0xf]
    %v352 = vld [vmem:[%s342 + $0x24] sm:$0xf]
    %v353 = vld [vmem:[%s342 + $0x28] sm:$0xf]
    %v354 = vld [vmem:[%s342 + $0x2c] sm:$0xf]
    %v355 = vld [vmem:[%s342 + $0x30] sm:$0xf]
    %v356 = vld [vmem:[%s342 + $0x34] sm:$0xf]
    %v357 = vld [vmem:[%s342 + $0x38] sm:$0xf]
    %v358 = vld [vmem:[%s342 + $0x3c] sm:$0xf]
    %v359 = vld [vmem:[#allocation8 + $0x4] sm:$0xff]
    %v360 = vld [vmem:[#allocation8 + $0x10] sm:$0xff]
    %v361 = vld [vmem:[#allocation8 + $0x1c] sm:$0xff]
    %v362 = vld [vmem:[#allocation8 + $0x28] sm:$0xff]
    %v363 = vld [vmem:[#allocation8 + $0x34] sm:$0xff]
    %v364 = vld [vmem:[#allocation8 + $0x40] sm:$0xff]
    %v365 = vld [vmem:[#allocation8 + $0x4c] sm:$0xff]
    %v366 = vld [vmem:[#allocation8 + $0x58] sm:$0xff]
    %v367 = vld [vmem:[#allocation8 + $0x64] sm:$0xff]
    %v368 = vld [vmem:[#allocation8 + $0x70] sm:$0xff]
    %v369 = vld [vmem:[#allocation8 + $0x7c] sm:$0xff]
    %v370 = vld [vmem:[#allocation8 + $0x88] sm:$0xff]
    %v371 = vld [vmem:[#allocation8 + $0x94] sm:$0xff]
    %v372 = vld [vmem:[#allocation8 + $0xa0] sm:$0xff]
    %v373 = vld [vmem:[#allocation8 + $0xac] sm:$0xff]
    %v374 = vld [vmem:[#allocation8 + $0xb8] sm:$0xff]
    %s375 = scalar_lea.vmem [#allocation9], 2
    %v376 = vld [vmem:[%s375] ss:$2 sm:$0x3]
    %v378 = vlaneseq
    %v379 = vshrl.u32 %v378, 7
    %v380 = vsub.s32 0, %v379
    %v381 = vrot.slane %v376, %v380
    %v382 = vlaneseq
    %v383 = vshrl.u32 %v382, 7
    %v384 = vsub.s32 1, %v383
    %v385 = vrot.slane %v376, %v384
    %v404 = vunpack.c.l.b16 %v343
    %v405 = vunpack.c.l.b16 %v344
    %v406 = vunpack.c.l.b16 %v345
    %v407 = vunpack.c.l.b16 %v346
    %v408 = vunpack.c.l.b16 %v347
    %v409 = vunpack.c.l.b16 %v348
    %v410 = vunpack.c.l.b16 %v349
    %v411 = vunpack.c.l.b16 %v350
    %v412 = vunpack.c.l.b16 %v351
    %v413 = vunpack.c.l.b16 %v352
    %v414 = vunpack.c.l.b16 %v353
    %v415 = vunpack.c.l.b16 %v354
    %v416 = vunpack.c.l.b16 %v355
    %v417 = vunpack.c.l.b16 %v356
    %v418 = vunpack.c.l.b16 %v357
    %v419 = vunpack.c.l.b16 %v358
    %v420 = vpack.c.b16 %v405, %v404
    %v421 = vpack.c.b16 %v407, %v406
    %v422 = vpack.c.b16 %v409, %v408
    %v423 = vpack.c.b16 %v411, %v410
    %v424 = vpack.c.b16 %v413, %v412
    %v425 = vpack.c.b16 %v415, %v414
    %v426 = vpack.c.b16 %v417, %v416
    %v427 = vpack.c.b16 %v419, %v418
    %v452 = vunpack.c.l.b16 %v359
    %v453 = vunpack.c.h.b16 %v359
    %v454 = vunpack.c.l.b16 %v360
    %v455 = vunpack.c.h.b16 %v360
    %v456 = vunpack.c.l.b16 %v361
    %v457 = vunpack.c.h.b16 %v361
    %v458 = vunpack.c.l.b16 %v362
    %v459 = vunpack.c.h.b16 %v362
    %v460 = vunpack.c.l.b16 %v363
    %v461 = vunpack.c.h.b16 %v363
    %v462 = vunpack.c.l.b16 %v364
    %v463 = vunpack.c.h.b16 %v364
    %v464 = vunpack.c.l.b16 %v365
    %v465 = vunpack.c.h.b16 %v365
    %v466 = vunpack.c.l.b16 %v366
    %v467 = vunpack.c.h.b16 %v366
    %v468 = vunpack.c.l.b16 %v367
    %v469 = vunpack.c.h.b16 %v367
    %v470 = vunpack.c.l.b16 %v368
    %v471 = vunpack.c.h.b16 %v368
    %v472 = vunpack.c.l.b16 %v369
    %v473 = vunpack.c.h.b16 %v369
    %v474 = vunpack.c.l.b16 %v370
    %v475 = vunpack.c.h.b16 %v370
    %v476 = vunpack.c.l.b16 %v371
    %v477 = vunpack.c.h.b16 %v371
    %v478 = vunpack.c.l.b16 %v372
    %v479 = vunpack.c.h.b16 %v372
    %v480 = vunpack.c.l.b16 %v373
    %v481 = vunpack.c.h.b16 %v373
    %v482 = vunpack.c.l.b16 %v374
    %v483 = vunpack.c.h.b16 %v374
    %v484 = vpack.c.b16 %v454, %v452
    %v485 = vpack.c.b16 %v455, %v453
    %v486 = vpack.c.b16 %v458, %v456
    %v487 = vpack.c.b16 %v459, %v457
    %v488 = vpack.c.b16 %v462, %v460
    %v489 = vpack.c.b16 %v463, %v461
    %v490 = vpack.c.b16 %v466, %v464
    %v491 = vpack.c.b16 %v467, %v465
    %v492 = vpack.c.b16 %v470, %v468
    %v493 = vpack.c.b16 %v471, %v469
    %v494 = vpack.c.b16 %v474, %v472
    %v495 = vpack.c.b16 %v475, %v473
    %v496 = vpack.c.b16 %v478, %v476
    %v497 = vpack.c.b16 %v479, %v477
    %v498 = vpack.c.b16 %v482, %v480
    %v499 = vpack.c.b16 %v483, %v481
    %516 = vmatprep.subr.bf16.mxu0 %v499
    %517 = vmatpush1.bf16.msra.mxu0 %v498
    %518 = vmatprep.subr.bf16.mxu0 %v497
    %519 = vmatpush1.bf16.msra.mxu0 %v496
    %520 = vmatprep.subr.bf16.mxu0 %v495
    %521 = vmatpush1.bf16.msra.mxu0 %v494
    %522 = vmatprep.subr.bf16.mxu0 %v493
    %523 = vmatpush1.bf16.msra.mxu0 %v492
    %524 = vmatprep.subr.bf16.mxu0 %v491
    %525 = vmatpush1.bf16.msra.mxu0 %v490
    %526 = vmatprep.subr.bf16.mxu0 %v489
    %527 = vmatpush1.bf16.msra.mxu0 %v488
    %528 = vmatprep.subr.bf16.mxu0 %v487
    %529 = vmatpush1.bf16.msra.mxu0 %v486
    %530 = vmatprep.subr.bf16.mxu0 %v485
    %531 = vmatpush1.bf16.msra.mxu0 %v484
    %532 = vmatprep.subr.bf16.mxu0 0
    %533 = vmatpush2.bf16.msra.mxu0 0
    %534 = vmatprep.subr.bf16.mxu0 0
    %535 = vmatpush2.bf16.msra.mxu0 0
    %536 = vmatprep.subr.bf16.mxu0 0
    %537 = vmatpush2.bf16.msra.mxu0 0
    %538 = vmatprep.subr.bf16.mxu0 0
    %539 = vmatpush2.bf16.msra.mxu0 0
    %540 = vmatprep.subr.bf16.mxu0 0
    %541 = vmatpush2.bf16.msra.mxu0 0
    %542 = vmatprep.subr.bf16.mxu0 0
    %543 = vmatpush2.bf16.msra.mxu0 0
    %544 = vmatprep.subr.bf16.mxu0 0
    %545 = vmatpush2.bf16.msra.mxu0 0
    %546 = vmatprep.subr.bf16.mxu0 0
    %547 = vmatpush2.bf16.msra.mxu0 0
    %548 = vmatprep.mubr.bf16.mxu0 0
    %549 = vmatmul.mubr.bf16.gmra.mxu0 %v420
    %v550 = vpop.f32.mrf.mxu0
    %v551 = vadd.f32 %v381, %v550
    %v552 = vpop.f32.mrf.mxu0
    %v553 = vadd.f32 %v385, %v552
    %v554 = vpop.f32.mrf.mxu0
    %v555 = vadd.f32 %v381, %v554
    %v556 = vpop.f32.mrf.mxu0
    %v557 = vadd.f32 %v385, %v556
    %558 = vmatprep.mubr.bf16.mxu0 0
    %559 = vmatmul.mubr.bf16.gmra.mxu0 %v421
    %v560 = vpop.f32.mrf.mxu0
    %v561 = vadd.f32 %v381, %v560
    %v562 = vpop.f32.mrf.mxu0
    %v563 = vadd.f32 %v385, %v562
    %v564 = vpop.f32.mrf.mxu0
    %v565 = vadd.f32 %v381, %v564
    %v566 = vpop.f32.mrf.mxu0
    %v567 = vadd.f32 %v385, %v566
    %568 = vmatprep.mubr.bf16.mxu0 0
    %569 = vmatmul.mubr.bf16.gmra.mxu0 %v422
    %v570 = vpop.f32.mrf.mxu0
    %v571 = vadd.f32 %v381, %v570
    %v572 = vpop.f32.mrf.mxu0
    %v573 = vadd.f32 %v385, %v572
    %v574 = vpop.f32.mrf.mxu0
    %v575 = vadd.f32 %v381, %v574
    %v576 = vpop.f32.mrf.mxu0
    %v577 = vadd.f32 %v385, %v576
    %578 = vmatprep.mubr.bf16.mxu0 0
    %579 = vmatmul.mubr.bf16.gmra.mxu0 %v423
    %v580 = vpop.f32.mrf.mxu0
    %v581 = vadd.f32 %v381, %v580
    %v582 = vpop.f32.mrf.mxu0
    %v583 = vadd.f32 %v385, %v582
    %v584 = vpop.f32.mrf.mxu0
    %v585 = vadd.f32 %v381, %v584
    %v586 = vpop.f32.mrf.mxu0
    %v587 = vadd.f32 %v385, %v586
    %588 = vmatprep.mubr.bf16.mxu0 0
    %589 = vmatmul.mubr.bf16.gmra.mxu0 %v424
    %v590 = vpop.f32.mrf.mxu0
    %v591 = vadd.f32 %v381, %v590
    %v592 = vpop.f32.mrf.mxu0
    %v593 = vadd.f32 %v385, %v592
    %v594 = vpop.f32.mrf.mxu0
    %v595 = vadd.f32 %v381, %v594
    %v596 = vpop.f32.mrf.mxu0
    %v597 = vadd.f32 %v385, %v596
    %598 = vmatprep.mubr.bf16.mxu0 0
    %599 = vmatmul.mubr.bf16.gmra.mxu0 %v425
    %v600 = vpop.f32.mrf.mxu0
    %v601 = vadd.f32 %v381, %v600
    %v602 = vpop.f32.mrf.mxu0
    %v603 = vadd.f32 %v385, %v602
    %v604 = vpop.f32.mrf.mxu0
    %v605 = vadd.f32 %v381, %v604
    %v606 = vpop.f32.mrf.mxu0
    %v607 = vadd.f32 %v385, %v606
    %608 = vmatprep.mubr.bf16.mxu0 0
    %609 = vmatmul.mubr.bf16.gmra.mxu0 %v426
    %v610 = vpop.f32.mrf.mxu0
    %v611 = vadd.f32 %v381, %v610
    %v612 = vpop.f32.mrf.mxu0
    %v613 = vadd.f32 %v385, %v612
    %v614 = vpop.f32.mrf.mxu0
    %v615 = vadd.f32 %v381, %v614
    %v616 = vpop.f32.mrf.mxu0
    %v617 = vadd.f32 %v385, %v616
    %618 = vmatprep.mubr.bf16.mxu0 0
    %619 = vmatmul.mubr.bf16.gmra.mxu0 %v427
    %v620 = vpop.f32.mrf.mxu0
    %v621 = vadd.f32 %v381, %v620
    %v622 = vpop.f32.mrf.mxu0
    %v623 = vadd.f32 %v385, %v622
    %v624 = vpop.f32.mrf.mxu0
    %v625 = vadd.f32 %v381, %v624
    %v626 = vpop.f32.mrf.mxu0
    %v627 = vadd.f32 %v385, %v626
    %628 = vdwg.mxu0
    %v629 = vmax.f32 %v551, 0.0
    %v630 = vmax.f32 %v553, 0.0
    %v631 = vmax.f32 %v555, 0.0
    %v632 = vmax.f32 %v557, 0.0
    %v633 = vmax.f32 %v561, 0.0
    %v634 = vmax.f32 %v563, 0.0
    %v635 = vmax.f32 %v565, 0.0
    %v636 = vmax.f32 %v567, 0.0
    %v637 = vmax.f32 %v571, 0.0
    %v638 = vmax.f32 %v573, 0.0
    %v639 = vmax.f32 %v575, 0.0
    %v640 = vmax.f32 %v577, 0.0
    %v641 = vmax.f32 %v581, 0.0
    %v642 = vmax.f32 %v583, 0.0
    %v643 = vmax.f32 %v585, 0.0
    %v644 = vmax.f32 %v587, 0.0
    %v645 = vmax.f32 %v591, 0.0
    %v646 = vmax.f32 %v593, 0.0
    %v647 = vmax.f32 %v595, 0.0
    %v648 = vmax.f32 %v597, 0.0
    %v649 = vmax.f32 %v601, 0.0
    %v650 = vmax.f32 %v603, 0.0
    %v651 = vmax.f32 %v605, 0.0
    %v652 = vmax.f32 %v607, 0.0
    %v653 = vmax.f32 %v611, 0.0
    %v654 = vmax.f32 %v613, 0.0
    %v655 = vmax.f32 %v615, 0.0
    %v656 = vmax.f32 %v617, 0.0
    %v657 = vmax.f32 %v621, 0.0
    %v658 = vmax.f32 %v623, 0.0
    %v659 = vmax.f32 %v625, 0.0
    %v660 = vmax.f32 %v627, 0.0
    %v661 = vpack.c.bf16 %v631, %v629
    %v662 = vpack.c.bf16 %v632, %v630
    %v663 = vpack.c.bf16 %v635, %v633
    %v664 = vpack.c.bf16 %v636, %v634
    %v665 = vpack.c.bf16 %v639, %v637
    %v666 = vpack.c.bf16 %v640, %v638
    %v667 = vpack.c.bf16 %v643, %v641
    %v668 = vpack.c.bf16 %v644, %v642
    %v669 = vpack.c.bf16 %v647, %v645
    %v670 = vpack.c.bf16 %v648, %v646
    %v671 = vpack.c.bf16 %v651, %v649
    %v672 = vpack.c.bf16 %v652, %v650
    %v673 = vpack.c.bf16 %v655, %v653
    %v674 = vpack.c.bf16 %v656, %v654
    %v675 = vpack.c.bf16 %v659, %v657
    %v676 = vpack.c.bf16 %v660, %v658
    %s677 = scalar_lea.vmem [#allocation6], 64
    %v678 = vld [vmem:[%s677] sm:$0xf]
    %v679 = vld [vmem:[%s677 + $0x4] sm:$0xf]
    %v680 = vld [vmem:[%s677 + $0x8] sm:$0xf]
    %v681 = vld [vmem:[%s677 + $0xc] sm:$0xf]
    %v682 = vld [vmem:[%s677 + $0x10] sm:$0xf]
    %v683 = vld [vmem:[%s677 + $0x14] sm:$0xf]
    %v684 = vld [vmem:[%s677 + $0x18] sm:$0xf]
    %v685 = vld [vmem:[%s677 + $0x1c] sm:$0xf]
    %v686 = vld [vmem:[%s677 + $0x20] sm:$0xf]
    %v687 = vld [vmem:[%s677 + $0x24] sm:$0xf]
    %v688 = vld [vmem:[%s677 + $0x28] sm:$0xf]
    %v689 = vld [vmem:[%s677 + $0x2c] sm:$0xf]
    %v690 = vld [vmem:[%s677 + $0x30] sm:$0xf]
    %v691 = vld [vmem:[%s677 + $0x34] sm:$0xf]
    %v692 = vld [vmem:[%s677 + $0x38] sm:$0xf]
    %v693 = vld [vmem:[%s677 + $0x3c] sm:$0xf]
    %v710 = vunpack.c.l.b16 %v678
    %v711 = vunpack.c.l.b16 %v679
    %v712 = vunpack.c.l.b16 %v680
    %v713 = vunpack.c.l.b16 %v681
    %v714 = vunpack.c.l.b16 %v682
    %v715 = vunpack.c.l.b16 %v683
    %v716 = vunpack.c.l.b16 %v684
    %v717 = vunpack.c.l.b16 %v685
    %v718 = vunpack.c.l.b16 %v686
    %v719 = vunpack.c.l.b16 %v687
    %v720 = vunpack.c.l.b16 %v688
    %v721 = vunpack.c.l.b16 %v689
    %v722 = vunpack.c.l.b16 %v690
    %v723 = vunpack.c.l.b16 %v691
    %v724 = vunpack.c.l.b16 %v692
    %v725 = vunpack.c.l.b16 %v693
    %v726 = vpack.c.b16 %v711, %v710
    %v727 = vpack.c.b16 %v713, %v712
    %v728 = vpack.c.b16 %v715, %v714
    %v729 = vpack.c.b16 %v717, %v716
    %v730 = vpack.c.b16 %v719, %v718
    %v731 = vpack.c.b16 %v721, %v720
    %v732 = vpack.c.b16 %v723, %v722
    %v733 = vpack.c.b16 %v725, %v724
    %742 = vmatprep.subr.bf16.mxu0 0
    %743 = vmatpush1.bf16.msra.mxu0 %v675
    %744 = vmatprep.subr.bf16.mxu0 0
    %745 = vmatpush1.bf16.msra.mxu0 %v673
    %746 = vmatprep.subr.bf16.mxu0 0
    %747 = vmatpush1.bf16.msra.mxu0 %v671
    %748 = vmatprep.subr.bf16.mxu0 0
    %749 = vmatpush1.bf16.msra.mxu0 %v669
    %750 = vmatprep.subr.bf16.mxu0 0
    %751 = vmatpush1.bf16.msra.mxu0 %v667
    %752 = vmatprep.subr.bf16.mxu0 0
    %753 = vmatpush1.bf16.msra.mxu0 %v665
    %754 = vmatprep.subr.bf16.mxu0 0
    %755 = vmatpush1.bf16.msra.mxu0 %v663
    %756 = vmatprep.subr.bf16.mxu0 0
    %757 = vmatpush1.bf16.msra.mxu0 %v661
    %758 = vmatprep.subr.bf16.mxu0 0
    %759 = vmatpush2.bf16.msra.mxu0 0
    %760 = vmatprep.subr.bf16.mxu0 0
    %761 = vmatpush2.bf16.msra.mxu0 0
    %762 = vmatprep.subr.bf16.mxu0 0
    %763 = vmatpush2.bf16.msra.mxu0 0
    %764 = vmatprep.subr.bf16.mxu0 0
    %765 = vmatpush2.bf16.msra.mxu0 0
    %766 = vmatprep.subr.bf16.mxu0 0
    %767 = vmatpush2.bf16.msra.mxu0 0
    %768 = vmatprep.subr.bf16.mxu0 0
    %769 = vmatpush2.bf16.msra.mxu0 0
    %770 = vmatprep.subr.bf16.mxu0 0
    %771 = vmatpush2.bf16.msra.mxu0 0
    %772 = vmatprep.subr.bf16.mxu0 0
    %773 = vmatpush2.bf16.msra.mxu0 0
    %774 = vmatprep.mubr.bf16.mxu0 0
    %775 = vmatmul.mubr.bf16.gmra.mxu0 %v726
    %v776 = vpop.f32.mrf.mxu0
    %v777 = vadd.f32 0.0, %v776
    %v778 = vpop.f32.mrf.mxu0
    %v779 = vpop.f32.mrf.mxu0
    %v780 = vadd.f32 0.0, %v779
    %v781 = vpop.f32.mrf.mxu0
    %782 = vmatprep.mubr.bf16.mxu0 0
    %783 = vmatmul.mubr.bf16.gmra.mxu0 %v727
    %v784 = vpop.f32.mrf.mxu0
    %v785 = vadd.f32 0.0, %v784
    %v786 = vpop.f32.mrf.mxu0
    %v787 = vpop.f32.mrf.mxu0
    %v788 = vadd.f32 0.0, %v787
    %v789 = vpop.f32.mrf.mxu0
    %790 = vmatprep.mubr.bf16.mxu0 0
    %791 = vmatmul.mubr.bf16.gmra.mxu0 %v728
    %v792 = vpop.f32.mrf.mxu0
    %v793 = vadd.f32 0.0, %v792
    %v794 = vpop.f32.mrf.mxu0
    %v795 = vpop.f32.mrf.mxu0
    %v796 = vadd.f32 0.0, %v795
    %v797 = vpop.f32.mrf.mxu0
    %798 = vmatprep.mubr.bf16.mxu0 0
    %799 = vmatmul.mubr.bf16.gmra.mxu0 %v729
    %v800 = vpop.f32.mrf.mxu0
    %v801 = vadd.f32 0.0, %v800
    %v802 = vpop.f32.mrf.mxu0
    %v803 = vpop.f32.mrf.mxu0
    %v804 = vadd.f32 0.0, %v803
    %v805 = vpop.f32.mrf.mxu0
    %806 = vmatprep.mubr.bf16.mxu0 0
    %807 = vmatmul.mubr.bf16.gmra.mxu0 %v730
    %v808 = vpop.f32.mrf.mxu0
    %v809 = vadd.f32 0.0, %v808
    %v810 = vpop.f32.mrf.mxu0
    %v811 = vpop.f32.mrf.mxu0
    %v812 = vadd.f32 0.0, %v811
    %v813 = vpop.f32.mrf.mxu0
    %814 = vmatprep.mubr.bf16.mxu0 0
    %815 = vmatmul.mubr.bf16.gmra.mxu0 %v731
    %v816 = vpop.f32.mrf.mxu0
    %v817 = vadd.f32 0.0, %v816
    %v818 = vpop.f32.mrf.mxu0
    %v819 = vpop.f32.mrf.mxu0
    %v820 = vadd.f32 0.0, %v819
    %v821 = vpop.f32.mrf.mxu0
    %822 = vmatprep.mubr.bf16.mxu0 0
    %823 = vmatmul.mubr.bf16.gmra.mxu0 %v732
    %v824 = vpop.f32.mrf.mxu0
    %v825 = vadd.f32 0.0, %v824
    %v826 = vpop.f32.mrf.mxu0
    %v827 = vpop.f32.mrf.mxu0
    %v828 = vadd.f32 0.0, %v827
    %v829 = vpop.f32.mrf.mxu0
    %830 = vmatprep.mubr.bf16.mxu0 0
    %831 = vmatmul.mubr.bf16.gmra.mxu0 %v733
    %v832 = vpop.f32.mrf.mxu0
    %v833 = vadd.f32 0.0, %v832
    %v834 = vpop.f32.mrf.mxu0
    %v835 = vpop.f32.mrf.mxu0
    %v836 = vadd.f32 0.0, %v835
    %v837 = vpop.f32.mrf.mxu0
    %838 = vdwg.mxu0
    %s839 = scalar_lea.vmem [#allocation6], 128
    %v840 = vld [vmem:[%s839] sm:$0xf]
    %v841 = vld [vmem:[%s839 + $0x4] sm:$0xf]
    %v842 = vld [vmem:[%s839 + $0x8] sm:$0xf]
    %v843 = vld [vmem:[%s839 + $0xc] sm:$0xf]
    %v844 = vld [vmem:[%s839 + $0x10] sm:$0xf]
    %v845 = vld [vmem:[%s839 + $0x14] sm:$0xf]
    %v846 = vld [vmem:[%s839 + $0x18] sm:$0xf]
    %v847 = vld [vmem:[%s839 + $0x1c] sm:$0xf]
    %v848 = vld [vmem:[%s839 + $0x20] sm:$0xf]
    %v849 = vld [vmem:[%s839 + $0x24] sm:$0xf]
    %v850 = vld [vmem:[%s839 + $0x28] sm:$0xf]
    %v851 = vld [vmem:[%s839 + $0x2c] sm:$0xf]
    %v852 = vld [vmem:[%s839 + $0x30] sm:$0xf]
    %v853 = vld [vmem:[%s839 + $0x34] sm:$0xf]
    %v854 = vld [vmem:[%s839 + $0x38] sm:$0xf]
    %v855 = vld [vmem:[%s839 + $0x3c] sm:$0xf]
    %v872 = vunpack.c.l.b16 %v840
    %v873 = vunpack.c.l.b16 %v841
    %v874 = vunpack.c.l.b16 %v842
    %v875 = vunpack.c.l.b16 %v843
    %v876 = vunpack.c.l.b16 %v844
    %v877 = vunpack.c.l.b16 %v845
    %v878 = vunpack.c.l.b16 %v846
    %v879 = vunpack.c.l.b16 %v847
    %v880 = vunpack.c.l.b16 %v848
    %v881 = vunpack.c.l.b16 %v849
    %v882 = vunpack.c.l.b16 %v850
    %v883 = vunpack.c.l.b16 %v851
    %v884 = vunpack.c.l.b16 %v852
    %v885 = vunpack.c.l.b16 %v853
    %v886 = vunpack.c.l.b16 %v854
    %v887 = vunpack.c.l.b16 %v855
    %v888 = vpack.c.b16 %v873, %v872
    %v889 = vpack.c.b16 %v875, %v874
    %v890 = vpack.c.b16 %v877, %v876
    %v891 = vpack.c.b16 %v879, %v878
    %v892 = vpack.c.b16 %v881, %v880
    %v893 = vpack.c.b16 %v883, %v882
    %v894 = vpack.c.b16 %v885, %v884
    %v895 = vpack.c.b16 %v887, %v886
    %904 = vmatprep.subr.bf16.mxu0 0
    %905 = vmatpush1.bf16.msra.mxu0 %v676
    %906 = vmatprep.subr.bf16.mxu0 0
    %907 = vmatpush1.bf16.msra.mxu0 %v674
    %908 = vmatprep.subr.bf16.mxu0 0
    %909 = vmatpush1.bf16.msra.mxu0 %v672
    %910 = vmatprep.subr.bf16.mxu0 0
    %911 = vmatpush1.bf16.msra.mxu0 %v670
    %912 = vmatprep.subr.bf16.mxu0 0
    %913 = vmatpush1.bf16.msra.mxu0 %v668
    %914 = vmatprep.subr.bf16.mxu0 0
    %915 = vmatpush1.bf16.msra.mxu0 %v666
    %916 = vmatprep.subr.bf16.mxu0 0
    %917 = vmatpush1.bf16.msra.mxu0 %v664
    %918 = vmatprep.subr.bf16.mxu0 0
    %919 = vmatpush1.bf16.msra.mxu0 %v662
    %920 = vmatprep.subr.bf16.mxu0 0
    %921 = vmatpush2.bf16.msra.mxu0 0
    %922 = vmatprep.subr.bf16.mxu0 0
    %923 = vmatpush2.bf16.msra.mxu0 0
    %924 = vmatprep.subr.bf16.mxu0 0
    %925 = vmatpush2.bf16.msra.mxu0 0
    %926 = vmatprep.subr.bf16.mxu0 0
    %927 = vmatpush2.bf16.msra.mxu0 0
    %928 = vmatprep.subr.bf16.mxu0 0
    %929 = vmatpush2.bf16.msra.mxu0 0
    %930 = vmatprep.subr.bf16.mxu0 0
    %931 = vmatpush2.bf16.msra.mxu0 0
    %932 = vmatprep.subr.bf16.mxu0 0
    %933 = vmatpush2.bf16.msra.mxu0 0
    %934 = vmatprep.subr.bf16.mxu0 0
    %935 = vmatpush2.bf16.msra.mxu0 0
    %936 = vmatprep.mubr.bf16.mxu0 0
    %937 = vmatmul.mubr.bf16.gmra.mxu0 %v888
    %v938 = vpop.f32.mrf.mxu0
    %v939 = vadd.f32 0.0, %v938
    %v940 = vpop.f32.mrf.mxu0
    %v941 = vpop.f32.mrf.mxu0
    %v942 = vadd.f32 0.0, %v941
    %v943 = vpop.f32.mrf.mxu0
    %944 = vmatprep.mubr.bf16.mxu0 0
    %945 = vmatmul.mubr.bf16.gmra.mxu0 %v889
    %v946 = vpop.f32.mrf.mxu0
    %v947 = vadd.f32 0.0, %v946
    %v948 = vpop.f32.mrf.mxu0
    %v949 = vpop.f32.mrf.mxu0
    %v950 = vadd.f32 0.0, %v949
    %v951 = vpop.f32.mrf.mxu0
    %952 = vmatprep.mubr.bf16.mxu0 0
    %953 = vmatmul.mubr.bf16.gmra.mxu0 %v890
    %v954 = vpop.f32.mrf.mxu0
    %v955 = vadd.f32 0.0, %v954
    %v956 = vpop.f32.mrf.mxu0
    %v957 = vpop.f32.mrf.mxu0
    %v958 = vadd.f32 0.0, %v957
    %v959 = vpop.f32.mrf.mxu0
    %960 = vmatprep.mubr.bf16.mxu0 0
    %961 = vmatmul.mubr.bf16.gmra.mxu0 %v891
    %v962 = vpop.f32.mrf.mxu0
    %v963 = vadd.f32 0.0, %v962
    %v964 = vpop.f32.mrf.mxu0
    %v965 = vpop.f32.mrf.mxu0
    %v966 = vadd.f32 0.0, %v965
    %v967 = vpop.f32.mrf.mxu0
    %968 = vmatprep.mubr.bf16.mxu0 0
    %969 = vmatmul.mubr.bf16.gmra.mxu0 %v892
    %v970 = vpop.f32.mrf.mxu0
    %v971 = vadd.f32 0.0, %v970
    %v972 = vpop.f32.mrf.mxu0
    %v973 = vpop.f32.mrf.mxu0
    %v974 = vadd.f32 0.0, %v973
    %v975 = vpop.f32.mrf.mxu0
    %976 = vmatprep.mubr.bf16.mxu0 0
    %977 = vmatmul.mubr.bf16.gmra.mxu0 %v893
    %v978 = vpop.f32.mrf.mxu0
    %v979 = vadd.f32 0.0, %v978
    %v980 = vpop.f32.mrf.mxu0
    %v981 = vpop.f32.mrf.mxu0
    %v982 = vadd.f32 0.0, %v981
    %v983 = vpop.f32.mrf.mxu0
    %984 = vmatprep.mubr.bf16.mxu0 0
    %985 = vmatmul.mubr.bf16.gmra.mxu0 %v894
    %v986 = vpop.f32.mrf.mxu0
    %v987 = vadd.f32 0.0, %v986
    %v988 = vpop.f32.mrf.mxu0
    %v989 = vpop.f32.mrf.mxu0
    %v990 = vadd.f32 0.0, %v989
    %v991 = vpop.f32.mrf.mxu0
    %992 = vmatprep.mubr.bf16.mxu0 0
    %993 = vmatmul.mubr.bf16.gmra.mxu0 %v895
    %v994 = vpop.f32.mrf.mxu0
    %v995 = vadd.f32 0.0, %v994
    %v996 = vpop.f32.mrf.mxu0
    %v997 = vpop.f32.mrf.mxu0
    %v998 = vadd.f32 0.0, %v997
    %v999 = vpop.f32.mrf.mxu0
    %1000 = vdwg.mxu0
    %v1017 = vunpack.c.l.b16 %v326
    %v1018 = vunpack.c.l.b16 %v327
    %v1019 = vunpack.c.l.b16 %v328
    %v1020 = vunpack.c.l.b16 %v329
    %v1021 = vunpack.c.l.b16 %v330
    %v1022 = vunpack.c.l.b16 %v331
    %v1023 = vunpack.c.l.b16 %v332
    %v1024 = vunpack.c.l.b16 %v333
    %v1025 = vunpack.c.l.b16 %v334
    %v1026 = vunpack.c.l.b16 %v335
    %v1027 = vunpack.c.l.b16 %v336
    %v1028 = vunpack.c.l.b16 %v337
    %v1029 = vunpack.c.l.b16 %v338
    %v1030 = vunpack.c.l.b16 %v339
    %v1031 = vunpack.c.l.b16 %v340
    %v1032 = vunpack.c.l.b16 %v341
    %v1033 = vpack.c.b16 %v1018, %v1017
    %v1034 = vpack.c.b16 %v1020, %v1019
    %v1035 = vpack.c.b16 %v1022, %v1021
    %v1036 = vpack.c.b16 %v1024, %v1023
    %v1037 = vpack.c.b16 %v1026, %v1025
    %v1038 = vpack.c.b16 %v1028, %v1027
    %v1039 = vpack.c.b16 %v1030, %v1029
    %v1040 = vpack.c.b16 %v1032, %v1031
    %1049 = vmatprep.subr.bf16.mxu0 0
    %1050 = vmatpush1.bf16.msra.mxu0 %v325
    %1051 = vmatprep.subr.bf16.mxu0 0
    %1052 = vmatpush1.bf16.msra.mxu0 %v324
    %1053 = vmatprep.subr.bf16.mxu0 0
    %1054 = vmatpush1.bf16.msra.mxu0 %v323
    %1055 = vmatprep.subr.bf16.mxu0 0
    %1056 = vmatpush1.bf16.msra.mxu0 %v322
    %1057 = vmatprep.subr.bf16.mxu0 0
    %1058 = vmatpush1.bf16.msra.mxu0 %v321
    %1059 = vmatprep.subr.bf16.mxu0 0
    %1060 = vmatpush1.bf16.msra.mxu0 %v320
    %1061 = vmatprep.subr.bf16.mxu0 0
    %1062 = vmatpush1.bf16.msra.mxu0 %v319
    %1063 = vmatprep.subr.bf16.mxu0 0
    %1064 = vmatpush1.bf16.msra.mxu0 %v318
    %1065 = vmatprep.subr.bf16.mxu0 0
    %1066 = vmatpush2.bf16.msra.mxu0 0
    %1067 = vmatprep.subr.bf16.mxu0 0
    %1068 = vmatpush2.bf16.msra.mxu0 0
    %1069 = vmatprep.subr.bf16.mxu0 0
    %1070 = vmatpush2.bf16.msra.mxu0 0
    %1071 = vmatprep.subr.bf16.mxu0 0
    %1072 = vmatpush2.bf16.msra.mxu0 0
    %1073 = vmatprep.subr.bf16.mxu0 0
    %1074 = vmatpush2.bf16.msra.mxu0 0
    %1075 = vmatprep.subr.bf16.mxu0 0
    %1076 = vmatpush2.bf16.msra.mxu0 0
    %1077 = vmatprep.subr.bf16.mxu0 0
    %1078 = vmatpush2.bf16.msra.mxu0 0
    %1079 = vmatprep.subr.bf16.mxu0 0
    %1080 = vmatpush2.bf16.msra.mxu0 0
    %1081 = vmatprep.mubr.bf16.mxu0 0
    %1082 = vmatmul.mubr.bf16.gmra.mxu0 %v1033
    %v1083 = vpop.f32.mrf.mxu0
    %v1084 = vadd.f32 %v939, %v1083
    %v1085 = vpop.f32.mrf.mxu0
    %v1086 = vpop.f32.mrf.mxu0
    %v1087 = vadd.f32 %v942, %v1086
    %v1088 = vpop.f32.mrf.mxu0
    %1089 = vmatprep.mubr.bf16.mxu0 0
    %1090 = vmatmul.mubr.bf16.gmra.mxu0 %v1034
    %v1091 = vpop.f32.mrf.mxu0
    %v1092 = vadd.f32 %v947, %v1091
    %v1093 = vpop.f32.mrf.mxu0
    %v1094 = vpop.f32.mrf.mxu0
    %v1095 = vadd.f32 %v950, %v1094
    %v1096 = vpop.f32.mrf.mxu0
    %1097 = vmatprep.mubr.bf16.mxu0 0
    %1098 = vmatmul.mubr.bf16.gmra.mxu0 %v1035
    %v1099 = vpop.f32.mrf.mxu0
    %v1100 = vadd.f32 %v955, %v1099
    %v1101 = vpop.f32.mrf.mxu0
    %v1102 = vpop.f32.mrf.mxu0
    %v1103 = vadd.f32 %v958, %v1102
    %v1104 = vpop.f32.mrf.mxu0
    %1105 = vmatprep.mubr.bf16.mxu0 0
    %1106 = vmatmul.mubr.bf16.gmra.mxu0 %v1036
    %v1107 = vpop.f32.mrf.mxu0
    %v1108 = vadd.f32 %v963, %v1107
    %v1109 = vpop.f32.mrf.mxu0
    %v1110 = vpop.f32.mrf.mxu0
    %v1111 = vadd.f32 %v966, %v1110
    %v1112 = vpop.f32.mrf.mxu0
    %1113 = vmatprep.mubr.bf16.mxu0 0
    %1114 = vmatmul.mubr.bf16.gmra.mxu0 %v1037
    %v1115 = vpop.f32.mrf.mxu0
    %v1116 = vadd.f32 %v971, %v1115
    %v1117 = vpop.f32.mrf.mxu0
    %v1118 = vpop.f32.mrf.mxu0
    %v1119 = vadd.f32 %v974, %v1118
    %v1120 = vpop.f32.mrf.mxu0
    %1121 = vmatprep.mubr.bf16.mxu0 0
    %1122 = vmatmul.mubr.bf16.gmra.mxu0 %v1038
    %v1123 = vpop.f32.mrf.mxu0
    %v1124 = vadd.f32 %v979, %v1123
    %v1125 = vpop.f32.mrf.mxu0
    %v1126 = vpop.f32.mrf.mxu0
    %v1127 = vadd.f32 %v982, %v1126
    %v1128 = vpop.f32.mrf.mxu0
    %1129 = vmatprep.mubr.bf16.mxu0 0
    %1130 = vmatmul.mubr.bf16.gmra.mxu0 %v1039
    %v1131 = vpop.f32.mrf.mxu0
    %v1132 = vadd.f32 %v987, %v1131
    %v1133 = vpop.f32.mrf.mxu0
    %v1134 = vpop.f32.mrf.mxu0
    %v1135 = vadd.f32 %v990, %v1134
    %v1136 = vpop.f32.mrf.mxu0
    %1137 = vmatprep.mubr.bf16.mxu0 0
    %1138 = vmatmul.mubr.bf16.gmra.mxu0 %v1040
    %v1139 = vpop.f32.mrf.mxu0
    %v1140 = vadd.f32 %v995, %v1139
    %v1141 = vpop.f32.mrf.mxu0
    %v1142 = vpop.f32.mrf.mxu0
    %v1143 = vadd.f32 %v998, %v1142
    %v1144 = vpop.f32.mrf.mxu0
    %1145 = vdwg.mxu0
    %v1146 = vpack.c.bf16 %v1087, %v1084
    %v1147 = vpack.c.bf16 %v1095, %v1092
    %v1148 = vpack.c.bf16 %v1103, %v1100
    %v1149 = vpack.c.bf16 %v1111, %v1108
    %v1150 = vpack.c.bf16 %v1119, %v1116
    %v1151 = vpack.c.bf16 %v1127, %v1124
    %v1152 = vpack.c.bf16 %v1135, %v1132
    %v1153 = vpack.c.bf16 %v1143, %v1140
    %v1162 = vunpack.c.l.b16 %v1146
    %v1163 = vunpack.c.h.b16 %v1146
    %v1164 = vunpack.c.l.b16 %v1147
    %v1165 = vunpack.c.h.b16 %v1147
    %v1166 = vunpack.c.l.b16 %v1148
    %v1167 = vunpack.c.h.b16 %v1148
    %v1168 = vunpack.c.l.b16 %v1149
    %v1169 = vunpack.c.h.b16 %v1149
    %v1170 = vunpack.c.l.b16 %v1150
    %v1171 = vunpack.c.h.b16 %v1150
    %v1172 = vunpack.c.l.b16 %v1151
    %v1173 = vunpack.c.h.b16 %v1151
    %v1174 = vunpack.c.l.b16 %v1152
    %v1175 = vunpack.c.h.b16 %v1152
    %v1176 = vunpack.c.l.b16 %v1153
    %v1177 = vunpack.c.h.b16 %v1153
    %v1178 = vpack.c.b16 %v1162, %v1162
    %v1179 = vpack.c.b16 %v1163, %v1163
    %v1180 = vpack.c.b16 %v1164, %v1164
    %v1181 = vpack.c.b16 %v1165, %v1165
    %v1182 = vpack.c.b16 %v1166, %v1166
    %v1183 = vpack.c.b16 %v1167, %v1167
    %v1184 = vpack.c.b16 %v1168, %v1168
    %v1185 = vpack.c.b16 %v1169, %v1169
    %v1186 = vpack.c.b16 %v1170, %v1170
    %v1187 = vpack.c.b16 %v1171, %v1171
    %v1188 = vpack.c.b16 %v1172, %v1172
    %v1189 = vpack.c.b16 %v1173, %v1173
    %v1190 = vpack.c.b16 %v1174, %v1174
    %v1191 = vpack.c.b16 %v1175, %v1175
    %v1192 = vpack.c.b16 %v1176, %v1176
    %v1193 = vpack.c.b16 %v1177, %v1177
    %s1210 = scalar_lea.vmem [#allocation2], 64
    %1211 = vst [vmem:[%s1210] sm:$0xf] %v1178
    %1212 = vst [vmem:[%s1210 + $0x4] sm:$0xf] %v1179
    %1213 = vst [vmem:[%s1210 + $0x8] sm:$0xf] %v1180
    %1214 = vst [vmem:[%s1210 + $0xc] sm:$0xf] %v1181
    %1215 = vst [vmem:[%s1210 + $0x10] sm:$0xf] %v1182
    %1216 = vst [vmem:[%s1210 + $0x14] sm:$0xf] %v1183
    %1217 = vst [vmem:[%s1210 + $0x18] sm:$0xf] %v1184
    %1218 = vst [vmem:[%s1210 + $0x1c] sm:$0xf] %v1185
    %1219 = vst [vmem:[%s1210 + $0x20] sm:$0xf] %v1186
    %1220 = vst [vmem:[%s1210 + $0x24] sm:$0xf] %v1187
    %1221 = vst [vmem:[%s1210 + $0x28] sm:$0xf] %v1188
    %1222 = vst [vmem:[%s1210 + $0x2c] sm:$0xf] %v1189
    %1223 = vst [vmem:[%s1210 + $0x30] sm:$0xf] %v1190
    %1224 = vst [vmem:[%s1210 + $0x34] sm:$0xf] %v1191
    %1225 = vst [vmem:[%s1210 + $0x38] sm:$0xf] %v1192
    %1226 = vst [vmem:[%s1210 + $0x3c] sm:$0xf] %v1193
    %v1227 = vpack.c.bf16 %v780, %v777
    %v1228 = vpack.c.bf16 %v788, %v785
    %v1229 = vpack.c.bf16 %v796, %v793
    %v1230 = vpack.c.bf16 %v804, %v801
    %v1231 = vpack.c.bf16 %v812, %v809
    %v1232 = vpack.c.bf16 %v820, %v817
    %v1233 = vpack.c.bf16 %v828, %v825
    %v1234 = vpack.c.bf16 %v836, %v833
    %v1243 = vunpack.c.l.b16 %v1227
    %v1244 = vunpack.c.h.b16 %v1227
    %v1245 = vunpack.c.l.b16 %v1228
    %v1246 = vunpack.c.h.b16 %v1228
    %v1247 = vunpack.c.l.b16 %v1229
    %v1248 = vunpack.c.h.b16 %v1229
    %v1249 = vunpack.c.l.b16 %v1230
    %v1250 = vunpack.c.h.b16 %v1230
    %v1251 = vunpack.c.l.b16 %v1231
    %v1252 = vunpack.c.h.b16 %v1231
    %v1253 = vunpack.c.l.b16 %v1232
    %v1254 = vunpack.c.h.b16 %v1232
    %v1255 = vunpack.c.l.b16 %v1233
    %v1256 = vunpack.c.h.b16 %v1233
    %v1257 = vunpack.c.l.b16 %v1234
    %v1258 = vunpack.c.h.b16 %v1234
    %v1259 = vpack.c.b16 %v1243, %v1243
    %v1260 = vpack.c.b16 %v1244, %v1244
    %v1261 = vpack.c.b16 %v1245, %v1245
    %v1262 = vpack.c.b16 %v1246, %v1246
    %v1263 = vpack.c.b16 %v1247, %v1247
    %v1264 = vpack.c.b16 %v1248, %v1248
    %v1265 = vpack.c.b16 %v1249, %v1249
    %v1266 = vpack.c.b16 %v1250, %v1250
    %v1267 = vpack.c.b16 %v1251, %v1251
    %v1268 = vpack.c.b16 %v1252, %v1252
    %v1269 = vpack.c.b16 %v1253, %v1253
    %v1270 = vpack.c.b16 %v1254, %v1254
    %v1271 = vpack.c.b16 %v1255, %v1255
    %v1272 = vpack.c.b16 %v1256, %v1256
    %v1273 = vpack.c.b16 %v1257, %v1257
    %v1274 = vpack.c.b16 %v1258, %v1258
    %1291 = vst [vmem:[#allocation2] sm:$0xf] %v1259
    %1292 = vst [vmem:[#allocation2 + $0x4] sm:$0xf] %v1260
    %1293 = vst [vmem:[#allocation2 + $0x8] sm:$0xf] %v1261
    %1294 = vst [vmem:[#allocation2 + $0xc] sm:$0xf] %v1262
    %1295 = vst [vmem:[#allocation2 + $0x10] sm:$0xf] %v1263
    %1296 = vst [vmem:[#allocation2 + $0x14] sm:$0xf] %v1264
    %1297 = vst [vmem:[#allocation2 + $0x18] sm:$0xf] %v1265
    %1298 = vst [vmem:[#allocation2 + $0x1c] sm:$0xf] %v1266
    %1299 = vst [vmem:[#allocation2 + $0x20] sm:$0xf] %v1267
    %1300 = vst [vmem:[#allocation2 + $0x24] sm:$0xf] %v1268
    %1301 = vst [vmem:[#allocation2 + $0x28] sm:$0xf] %v1269
    %1302 = vst [vmem:[#allocation2 + $0x2c] sm:$0xf] %v1270
    %1303 = vst [vmem:[#allocation2 + $0x30] sm:$0xf] %v1271
    %1304 = vst [vmem:[#allocation2 + $0x34] sm:$0xf] %v1272
    %1305 = vst [vmem:[#allocation2 + $0x38] sm:$0xf] %v1273
    %1306 = vst [vmem:[#allocation2 + $0x3c] sm:$0xf] %v1274
    %v1307 = vld [vmem:[#allocation2] sm:$0xf]
    %v1308 = vld [vmem:[#allocation2 + $0x4] sm:$0xf]
    %v1309 = vld [vmem:[#allocation2 + $0x8] sm:$0xf]
    %v1310 = vld [vmem:[#allocation2 + $0xc] sm:$0xf]
    %v1311 = vld [vmem:[#allocation2 + $0x10] sm:$0xf]
    %v1312 = vld [vmem:[#allocation2 + $0x14] sm:$0xf]
    %v1313 = vld [vmem:[#allocation2 + $0x18] sm:$0xf]
    %v1314 = vld [vmem:[#allocation2 + $0x1c] sm:$0xf]
    %v1315 = vld [vmem:[#allocation2 + $0x20] sm:$0xf]
    %v1316 = vld [vmem:[#allocation2 + $0x24] sm:$0xf]
    %v1317 = vld [vmem:[#allocation2 + $0x28] sm:$0xf]
    %v1318 = vld [vmem:[#allocation2 + $0x2c] sm:$0xf]
    %v1319 = vld [vmem:[#allocation2 + $0x30] sm:$0xf]
    %v1320 = vld [vmem:[#allocation2 + $0x34] sm:$0xf]
    %v1321 = vld [vmem:[#allocation2 + $0x38] sm:$0xf]
    %v1322 = vld [vmem:[#allocation2 + $0x3c] sm:$0xf]
    %s1323 = scalar_lea.vmem [#allocation8], 192
    %v1324 = vld [vmem:[%s1323] sm:$0xf]
    %v1325 = vld [vmem:[%s1323 + $0xc] sm:$0xf]
    %v1326 = vld [vmem:[%s1323 + $0x18] sm:$0xf]
    %v1327 = vld [vmem:[%s1323 + $0x24] sm:$0xf]
    %v1328 = vld [vmem:[%s1323 + $0x30] sm:$0xf]
    %v1329 = vld [vmem:[%s1323 + $0x3c] sm:$0xf]
    %v1330 = vld [vmem:[%s1323 + $0x48] sm:$0xf]
    %v1331 = vld [vmem:[%s1323 + $0x54] sm:$0xf]
    %v1332 = vld [vmem:[%s1323 + $0x60] sm:$0xf]
    %v1333 = vld [vmem:[%s1323 + $0x6c] sm:$0xf]
    %v1334 = vld [vmem:[%s1323 + $0x78] sm:$0xf]
    %v1335 = vld [vmem:[%s1323 + $0x84] sm:$0xf]
    %v1336 = vld [vmem:[%s1323 + $0x90] sm:$0xf]
    %v1337 = vld [vmem:[%s1323 + $0x9c] sm:$0xf]
    %v1338 = vld [vmem:[%s1323 + $0xa8] sm:$0xf]
    %v1339 = vld [vmem:[%s1323 + $0xb4] sm:$0xf]
    %v1340 = vld [vmem:[#allocation9 + $0x1] sm:$0x1]
    %v1341 = vlaneseq
    %v1342 = vshrl.u32 %v1341, 7
    %v1343 = vsub.s32 0, %v1342
    %v1344 = vrot.slane %v1340, %v1343
    %v1361 = vunpack.c.l.b16 %v1307
    %v1362 = vunpack.c.l.b16 %v1308
    %v1363 = vunpack.c.l.b16 %v1309
    %v1364 = vunpack.c.l.b16 %v1310
    %v1365 = vunpack.c.l.b16 %v1311
    %v1366 = vunpack.c.l.b16 %v1312
    %v1367 = vunpack.c.l.b16 %v1313
    %v1368 = vunpack.c.l.b16 %v1314
    %v1369 = vunpack.c.l.b16 %v1315
    %v1370 = vunpack.c.l.b16 %v1316
    %v1371 = vunpack.c.l.b16 %v1317
    %v1372 = vunpack.c.l.b16 %v1318
    %v1373 = vunpack.c.l.b16 %v1319
    %v1374 = vunpack.c.l.b16 %v1320
    %v1375 = vunpack.c.l.b16 %v1321
    %v1376 = vunpack.c.l.b16 %v1322
    %v1377 = vpack.c.b16 %v1362, %v1361
    %v1378 = vpack.c.b16 %v1364, %v1363
    %v1379 = vpack.c.b16 %v1366, %v1365
    %v1380 = vpack.c.b16 %v1368, %v1367
    %v1381 = vpack.c.b16 %v1370, %v1369
    %v1382 = vpack.c.b16 %v1372, %v1371
    %v1383 = vpack.c.b16 %v1374, %v1373
    %v1384 = vpack.c.b16 %v1376, %v1375
    %v1409 = vunpack.c.l.b16 %v1324
    %v1410 = vunpack.c.l.b16 %v1325
    %v1411 = vunpack.c.l.b16 %v1326
    %v1412 = vunpack.c.l.b16 %v1327
    %v1413 = vunpack.c.l.b16 %v1328
    %v1414 = vunpack.c.l.b16 %v1329
    %v1415 = vunpack.c.l.b16 %v1330
    %v1416 = vunpack.c.l.b16 %v1331
    %v1417 = vunpack.c.l.b16 %v1332
    %v1418 = vunpack.c.l.b16 %v1333
    %v1419 = vunpack.c.l.b16 %v1334
    %v1420 = vunpack.c.l.b16 %v1335
    %v1421 = vunpack.c.l.b16 %v1336
    %v1422 = vunpack.c.l.b16 %v1337
    %v1423 = vunpack.c.l.b16 %v1338
    %v1424 = vunpack.c.l.b16 %v1339
    %v1425 = vpack.c.b16 %v1410, %v1409
    %v1426 = vpack.c.b16 %v1412, %v1411
    %v1427 = vpack.c.b16 %v1414, %v1413
    %v1428 = vpack.c.b16 %v1416, %v1415
    %v1429 = vpack.c.b16 %v1418, %v1417
    %v1430 = vpack.c.b16 %v1420, %v1419
    %v1431 = vpack.c.b16 %v1422, %v1421
    %v1432 = vpack.c.b16 %v1424, %v1423
    %1441 = vmatprep.subr.bf16.mxu0 0
    %1442 = vmatpush1.bf16.msra.mxu0 %v1432
    %1443 = vmatprep.subr.bf16.mxu0 0
    %1444 = vmatpush1.bf16.msra.mxu0 %v1431
    %1445 = vmatprep.subr.bf16.mxu0 0
    %1446 = vmatpush1.bf16.msra.mxu0 %v1430
    %1447 = vmatprep.subr.bf16.mxu0 0
    %1448 = vmatpush1.bf16.msra.mxu0 %v1429
    %1449 = vmatprep.subr.bf16.mxu0 0
    %1450 = vmatpush1.bf16.msra.mxu0 %v1428
    %1451 = vmatprep.subr.bf16.mxu0 0
    %1452 = vmatpush1.bf16.msra.mxu0 %v1427
    %1453 = vmatprep.subr.bf16.mxu0 0
    %1454 = vmatpush1.bf16.msra.mxu0 %v1426
    %1455 = vmatprep.subr.bf16.mxu0 0
    %1456 = vmatpush1.bf16.msra.mxu0 %v1425
    %1457 = vmatprep.subr.bf16.mxu0 0
    %1458 = vmatpush2.bf16.msra.mxu0 0
    %1459 = vmatprep.subr.bf16.mxu0 0
    %1460 = vmatpush2.bf16.msra.mxu0 0
    %1461 = vmatprep.subr.bf16.mxu0 0
    %1462 = vmatpush2.bf16.msra.mxu0 0
    %1463 = vmatprep.subr.bf16.mxu0 0
    %1464 = vmatpush2.bf16.msra.mxu0 0
    %1465 = vmatprep.subr.bf16.mxu0 0
    %1466 = vmatpush2.bf16.msra.mxu0 0
    %1467 = vmatprep.subr.bf16.mxu0 0
    %1468 = vmatpush2.bf16.msra.mxu0 0
    %1469 = vmatprep.subr.bf16.mxu0 0
    %1470 = vmatpush2.bf16.msra.mxu0 0
    %1471 = vmatprep.subr.bf16.mxu0 0
    %1472 = vmatpush2.bf16.msra.mxu0 0
    %1473 = vmatprep.mubr.bf16.mxu0 0
    %1474 = vmatmul.mubr.bf16.gmra.mxu0 %v1377
    %v1475 = vpop.f32.mrf.mxu0
    %v1476 = vadd.f32 %v1344, %v1475
    %v1477 = vpop.f32.mrf.mxu0
    %v1478 = vpop.f32.mrf.mxu0
    %v1479 = vadd.f32 %v1344, %v1478
    %v1480 = vpop.f32.mrf.mxu0
    %1481 = vmatprep.mubr.bf16.mxu0 0
    %1482 = vmatmul.mubr.bf16.gmra.mxu0 %v1378
    %v1483 = vpop.f32.mrf.mxu0
    %v1484 = vadd.f32 %v1344, %v1483
    %v1485 = vpop.f32.mrf.mxu0
    %v1486 = vpop.f32.mrf.mxu0
    %v1487 = vadd.f32 %v1344, %v1486
    %v1488 = vpop.f32.mrf.mxu0
    %1489 = vmatprep.mubr.bf16.mxu0 0
    %1490 = vmatmul.mubr.bf16.gmra.mxu0 %v1379
    %v1491 = vpop.f32.mrf.mxu0
    %v1492 = vadd.f32 %v1344, %v1491
    %v1493 = vpop.f32.mrf.mxu0
    %v1494 = vpop.f32.mrf.mxu0
    %v1495 = vadd.f32 %v1344, %v1494
    %v1496 = vpop.f32.mrf.mxu0
    %1497 = vmatprep.mubr.bf16.mxu0 0
    %1498 = vmatmul.mubr.bf16.gmra.mxu0 %v1380
    %v1499 = vpop.f32.mrf.mxu0
    %v1500 = vadd.f32 %v1344, %v1499
    %v1501 = vpop.f32.mrf.mxu0
    %v1502 = vpop.f32.mrf.mxu0
    %v1503 = vadd.f32 %v1344, %v1502
    %v1504 = vpop.f32.mrf.mxu0
    %1505 = vmatprep.mubr.bf16.mxu0 0
    %1506 = vmatmul.mubr.bf16.gmra.mxu0 %v1381
    %v1507 = vpop.f32.mrf.mxu0
    %v1508 = vadd.f32 %v1344, %v1507
    %v1509 = vpop.f32.mrf.mxu0
    %v1510 = vpop.f32.mrf.mxu0
    %v1511 = vadd.f32 %v1344, %v1510
    %v1512 = vpop.f32.mrf.mxu0
    %1513 = vmatprep.mubr.bf16.mxu0 0
    %1514 = vmatmul.mubr.bf16.gmra.mxu0 %v1382
    %v1515 = vpop.f32.mrf.mxu0
    %v1516 = vadd.f32 %v1344, %v1515
    %v1517 = vpop.f32.mrf.mxu0
    %v1518 = vpop.f32.mrf.mxu0
    %v1519 = vadd.f32 %v1344, %v1518
    %v1520 = vpop.f32.mrf.mxu0
    %1521 = vmatprep.mubr.bf16.mxu0 0
    %1522 = vmatmul.mubr.bf16.gmra.mxu0 %v1383
    %v1523 = vpop.f32.mrf.mxu0
    %v1524 = vadd.f32 %v1344, %v1523
    %v1525 = vpop.f32.mrf.mxu0
    %v1526 = vpop.f32.mrf.mxu0
    %v1527 = vadd.f32 %v1344, %v1526
    %v1528 = vpop.f32.mrf.mxu0
    %1529 = vmatprep.mubr.bf16.mxu0 0
    %1530 = vmatmul.mubr.bf16.gmra.mxu0 %v1384
    %v1531 = vpop.f32.mrf.mxu0
    %v1532 = vadd.f32 %v1344, %v1531
    %v1533 = vpop.f32.mrf.mxu0
    %v1534 = vpop.f32.mrf.mxu0
    %v1535 = vadd.f32 %v1344, %v1534
    %v1536 = vpop.f32.mrf.mxu0
    %1537 = vdwg.mxu0
    %v1538 = vmax.f32 %v1476, 0.0
    %v1539 = vmax.f32 %v1479, 0.0
    %v1540 = vmax.f32 %v1484, 0.0
    %v1541 = vmax.f32 %v1487, 0.0
    %v1542 = vmax.f32 %v1492, 0.0
    %v1543 = vmax.f32 %v1495, 0.0
    %v1544 = vmax.f32 %v1500, 0.0
    %v1545 = vmax.f32 %v1503, 0.0
    %v1546 = vmax.f32 %v1508, 0.0
    %v1547 = vmax.f32 %v1511, 0.0
    %v1548 = vmax.f32 %v1516, 0.0
    %v1549 = vmax.f32 %v1519, 0.0
    %v1550 = vmax.f32 %v1524, 0.0
    %v1551 = vmax.f32 %v1527, 0.0
    %v1552 = vmax.f32 %v1532, 0.0
    %v1553 = vmax.f32 %v1535, 0.0
    %v1554 = vpack.c.bf16 %v1539, %v1538
    %v1555 = vpack.c.bf16 %v1541, %v1540
    %v1556 = vpack.c.bf16 %v1543, %v1542
    %v1557 = vpack.c.bf16 %v1545, %v1544
    %v1558 = vpack.c.bf16 %v1547, %v1546
    %v1559 = vpack.c.bf16 %v1549, %v1548
    %v1560 = vpack.c.bf16 %v1551, %v1550
    %v1561 = vpack.c.bf16 %v1553, %v1552
    %v1562 = vld [vmem:[#allocation6] sm:$0xf]
    %v1563 = vld [vmem:[#allocation6 + $0x4] sm:$0xf]
    %v1564 = vld [vmem:[#allocation6 + $0x8] sm:$0xf]
    %v1565 = vld [vmem:[#allocation6 + $0xc] sm:$0xf]
    %v1566 = vld [vmem:[#allocation6 + $0x10] sm:$0xf]
    %v1567 = vld [vmem:[#allocation6 + $0x14] sm:$0xf]
    %v1568 = vld [vmem:[#allocation6 + $0x18] sm:$0xf]
    %v1569 = vld [vmem:[#allocation6 + $0x1c] sm:$0xf]
    %v1570 = vld [vmem:[#allocation6 + $0x20] sm:$0xf]
    %v1571 = vld [vmem:[#allocation6 + $0x24] sm:$0xf]
    %v1572 = vld [vmem:[#allocation6 + $0x28] sm:$0xf]
    %v1573 = vld [vmem:[#allocation6 + $0x2c] sm:$0xf]
    %v1574 = vld [vmem:[#allocation6 + $0x30] sm:$0xf]
    %v1575 = vld [vmem:[#allocation6 + $0x34] sm:$0xf]
    %v1576 = vld [vmem:[#allocation6 + $0x38] sm:$0xf]
    %v1577 = vld [vmem:[#allocation6 + $0x3c] sm:$0xf]
    %v1578 = vld [vmem:[%s1210] sm:$0xf]
    %v1579 = vld [vmem:[%s1210 + $0x4] sm:$0xf]
    %v1580 = vld [vmem:[%s1210 + $0x8] sm:$0xf]
    %v1581 = vld [vmem:[%s1210 + $0xc] sm:$0xf]
    %v1582 = vld [vmem:[%s1210 + $0x10] sm:$0xf]
    %v1583 = vld [vmem:[%s1210 + $0x14] sm:$0xf]
    %v1584 = vld [vmem:[%s1210 + $0x18] sm:$0xf]
    %v1585 = vld [vmem:[%s1210 + $0x1c] sm:$0xf]
    %v1586 = vld [vmem:[%s1210 + $0x20] sm:$0xf]
    %v1587 = vld [vmem:[%s1210 + $0x24] sm:$0xf]
    %v1588 = vld [vmem:[%s1210 + $0x28] sm:$0xf]
    %v1589 = vld [vmem:[%s1210 + $0x2c] sm:$0xf]
    %v1590 = vld [vmem:[%s1210 + $0x30] sm:$0xf]
    %v1591 = vld [vmem:[%s1210 + $0x34] sm:$0xf]
    %v1592 = vld [vmem:[%s1210 + $0x38] sm:$0xf]
    %v1593 = vld [vmem:[%s1210 + $0x3c] sm:$0xf]
    %v1594 = vld [vmem:[%s1323 + $0x4] sm:$0xff]
    %v1595 = vld [vmem:[%s1323 + $0x10] sm:$0xff]
    %v1596 = vld [vmem:[%s1323 + $0x1c] sm:$0xff]
    %v1597 = vld [vmem:[%s1323 + $0x28] sm:$0xff]
    %v1598 = vld [vmem:[%s1323 + $0x34] sm:$0xff]
    %v1599 = vld [vmem:[%s1323 + $0x40] sm:$0xff]
    %v1600 = vld [vmem:[%s1323 + $0x4c] sm:$0xff]
    %v1601 = vld [vmem:[%s1323 + $0x58] sm:$0xff]
    %v1602 = vld [vmem:[%s1323 + $0x64] sm:$0xff]
    %v1603 = vld [vmem:[%s1323 + $0x70] sm:$0xff]
    %v1604 = vld [vmem:[%s1323 + $0x7c] sm:$0xff]
    %v1605 = vld [vmem:[%s1323 + $0x88] sm:$0xff]
    %v1606 = vld [vmem:[%s1323 + $0x94] sm:$0xff]
    %v1607 = vld [vmem:[%s1323 + $0xa0] sm:$0xff]
    %v1608 = vld [vmem:[%s1323 + $0xac] sm:$0xff]
    %v1609 = vld [vmem:[%s1323 + $0xb8] sm:$0xff]
    %s1610 = scalar_lea.vmem [#allocation9], 3
    %v1611 = vld [vmem:[%s1610] ss:$2 sm:$0x3]
    %v1613 = vlaneseq
    %v1614 = vshrl.u32 %v1613, 7
    %v1615 = vsub.s32 0, %v1614
    %v1616 = vrot.slane %v1611, %v1615
    %v1617 = vlaneseq
    %v1618 = vshrl.u32 %v1617, 7
    %v1619 = vsub.s32 1, %v1618
    %v1620 = vrot.slane %v1611, %v1619
    %v1639 = vunpack.c.l.b16 %v1578
    %v1640 = vunpack.c.l.b16 %v1579
    %v1641 = vunpack.c.l.b16 %v1580
    %v1642 = vunpack.c.l.b16 %v1581
    %v1643 = vunpack.c.l.b16 %v1582
    %v1644 = vunpack.c.l.b16 %v1583
    %v1645 = vunpack.c.l.b16 %v1584
    %v1646 = vunpack.c.l.b16 %v1585
    %v1647 = vunpack.c.l.b16 %v1586
    %v1648 = vunpack.c.l.b16 %v1587
    %v1649 = vunpack.c.l.b16 %v1588
    %v1650 = vunpack.c.l.b16 %v1589
    %v1651 = vunpack.c.l.b16 %v1590
    %v1652 = vunpack.c.l.b16 %v1591
    %v1653 = vunpack.c.l.b16 %v1592
    %v1654 = vunpack.c.l.b16 %v1593
    %v1655 = vpack.c.b16 %v1640, %v1639
    %v1656 = vpack.c.b16 %v1642, %v1641
    %v1657 = vpack.c.b16 %v1644, %v1643
    %v1658 = vpack.c.b16 %v1646, %v1645
    %v1659 = vpack.c.b16 %v1648, %v1647
    %v1660 = vpack.c.b16 %v1650, %v1649
    %v1661 = vpack.c.b16 %v1652, %v1651
    %v1662 = vpack.c.b16 %v1654, %v1653
    %v1687 = vunpack.c.l.b16 %v1594
    %v1688 = vunpack.c.h.b16 %v1594
    %v1689 = vunpack.c.l.b16 %v1595
    %v1690 = vunpack.c.h.b16 %v1595
    %v1691 = vunpack.c.l.b16 %v1596
    %v1692 = vunpack.c.h.b16 %v1596
    %v1693 = vunpack.c.l.b16 %v1597
    %v1694 = vunpack.c.h.b16 %v1597
    %v1695 = vunpack.c.l.b16 %v1598
    %v1696 = vunpack.c.h.b16 %v1598
    %v1697 = vunpack.c.l.b16 %v1599
    %v1698 = vunpack.c.h.b16 %v1599
    %v1699 = vunpack.c.l.b16 %v1600
    %v1700 = vunpack.c.h.b16 %v1600
    %v1701 = vunpack.c.l.b16 %v1601
    %v1702 = vunpack.c.h.b16 %v1601
    %v1703 = vunpack.c.l.b16 %v1602
    %v1704 = vunpack.c.h.b16 %v1602
    %v1705 = vunpack.c.l.b16 %v1603
    %v1706 = vunpack.c.h.b16 %v1603
    %v1707 = vunpack.c.l.b16 %v1604
    %v1708 = vunpack.c.h.b16 %v1604
    %v1709 = vunpack.c.l.b16 %v1605
    %v1710 = vunpack.c.h.b16 %v1605
    %v1711 = vunpack.c.l.b16 %v1606
    %v1712 = vunpack.c.h.b16 %v1606
    %v1713 = vunpack.c.l.b16 %v1607
    %v1714 = vunpack.c.h.b16 %v1607
    %v1715 = vunpack.c.l.b16 %v1608
    %v1716 = vunpack.c.h.b16 %v1608
    %v1717 = vunpack.c.l.b16 %v1609
    %v1718 = vunpack.c.h.b16 %v1609
    %v1719 = vpack.c.b16 %v1689, %v1687
    %v1720 = vpack.c.b16 %v1690, %v1688
    %v1721 = vpack.c.b16 %v1693, %v1691
    %v1722 = vpack.c.b16 %v1694, %v1692
    %v1723 = vpack.c.b16 %v1697, %v1695
    %v1724 = vpack.c.b16 %v1698, %v1696
    %v1725 = vpack.c.b16 %v1701, %v1699
    %v1726 = vpack.c.b16 %v1702, %v1700
    %v1727 = vpack.c.b16 %v1705, %v1703
    %v1728 = vpack.c.b16 %v1706, %v1704
    %v1729 = vpack.c.b16 %v1709, %v1707
    %v1730 = vpack.c.b16 %v1710, %v1708
    %v1731 = vpack.c.b16 %v1713, %v1711
    %v1732 = vpack.c.b16 %v1714, %v1712
    %v1733 = vpack.c.b16 %v1717, %v1715
    %v1734 = vpack.c.b16 %v1718, %v1716
    %1751 = vmatprep.subr.bf16.mxu0 %v1734
    %1752 = vmatpush1.bf16.msra.mxu0 %v1733
    %1753 = vmatprep.subr.bf16.mxu0 %v1732
    %1754 = vmatpush1.bf16.msra.mxu0 %v1731
    %1755 = vmatprep.subr.bf16.mxu0 %v1730
    %1756 = vmatpush1.bf16.msra.mxu0 %v1729
    %1757 = vmatprep.subr.bf16.mxu0 %v1728
    %1758 = vmatpush1.bf16.msra.mxu0 %v1727
    %1759 = vmatprep.subr.bf16.mxu0 %v1726
    %1760 = vmatpush1.bf16.msra.mxu0 %v1725
    %1761 = vmatprep.subr.bf16.mxu0 %v1724
    %1762 = vmatpush1.bf16.msra.mxu0 %v1723
    %1763 = vmatprep.subr.bf16.mxu0 %v1722
    %1764 = vmatpush1.bf16.msra.mxu0 %v1721
    %1765 = vmatprep.subr.bf16.mxu0 %v1720
    %1766 = vmatpush1.bf16.msra.mxu0 %v1719
    %1767 = vmatprep.subr.bf16.mxu0 0
    %1768 = vmatpush2.bf16.msra.mxu0 0
    %1769 = vmatprep.subr.bf16.mxu0 0
    %1770 = vmatpush2.bf16.msra.mxu0 0
    %1771 = vmatprep.subr.bf16.mxu0 0
    %1772 = vmatpush2.bf16.msra.mxu0 0
    %1773 = vmatprep.subr.bf16.mxu0 0
    %1774 = vmatpush2.bf16.msra.mxu0 0
    %1775 = vmatprep.subr.bf16.mxu0 0
    %1776 = vmatpush2.bf16.msra.mxu0 0
    %1777 = vmatprep.subr.bf16.mxu0 0
    %1778 = vmatpush2.bf16.msra.mxu0 0
    %1779 = vmatprep.subr.bf16.mxu0 0
    %1780 = vmatpush2.bf16.msra.mxu0 0
    %1781 = vmatprep.subr.bf16.mxu0 0
    %1782 = vmatpush2.bf16.msra.mxu0 0
    %1783 = vmatprep.mubr.bf16.mxu0 0
    %1784 = vmatmul.mubr.bf16.gmra.mxu0 %v1655
    %v1785 = vpop.f32.mrf.mxu0
    %v1786 = vadd.f32 %v1616, %v1785
    %v1787 = vpop.f32.mrf.mxu0
    %v1788 = vadd.f32 %v1620, %v1787
    %v1789 = vpop.f32.mrf.mxu0
    %v1790 = vadd.f32 %v1616, %v1789
    %v1791 = vpop.f32.mrf.mxu0
    %v1792 = vadd.f32 %v1620, %v1791
    %1793 = vmatprep.mubr.bf16.mxu0 0
    %1794 = vmatmul.mubr.bf16.gmra.mxu0 %v1656
    %v1795 = vpop.f32.mrf.mxu0
    %v1796 = vadd.f32 %v1616, %v1795
    %v1797 = vpop.f32.mrf.mxu0
    %v1798 = vadd.f32 %v1620, %v1797
    %v1799 = vpop.f32.mrf.mxu0
    %v1800 = vadd.f32 %v1616, %v1799
    %v1801 = vpop.f32.mrf.mxu0
    %v1802 = vadd.f32 %v1620, %v1801
    %1803 = vmatprep.mubr.bf16.mxu0 0
    %1804 = vmatmul.mubr.bf16.gmra.mxu0 %v1657
    %v1805 = vpop.f32.mrf.mxu0
    %v1806 = vadd.f32 %v1616, %v1805
    %v1807 = vpop.f32.mrf.mxu0
    %v1808 = vadd.f32 %v1620, %v1807
    %v1809 = vpop.f32.mrf.mxu0
    %v1810 = vadd.f32 %v1616, %v1809
    %v1811 = vpop.f32.mrf.mxu0
    %v1812 = vadd.f32 %v1620, %v1811
    %1813 = vmatprep.mubr.bf16.mxu0 0
    %1814 = vmatmul.mubr.bf16.gmra.mxu0 %v1658
    %v1815 = vpop.f32.mrf.mxu0
    %v1816 = vadd.f32 %v1616, %v1815
    %v1817 = vpop.f32.mrf.mxu0
    %v1818 = vadd.f32 %v1620, %v1817
    %v1819 = vpop.f32.mrf.mxu0
    %v1820 = vadd.f32 %v1616, %v1819
    %v1821 = vpop.f32.mrf.mxu0
    %v1822 = vadd.f32 %v1620, %v1821
    %1823 = vmatprep.mubr.bf16.mxu0 0
    %1824 = vmatmul.mubr.bf16.gmra.mxu0 %v1659
    %v1825 = vpop.f32.mrf.mxu0
    %v1826 = vadd.f32 %v1616, %v1825
    %v1827 = vpop.f32.mrf.mxu0
    %v1828 = vadd.f32 %v1620, %v1827
    %v1829 = vpop.f32.mrf.mxu0
    %v1830 = vadd.f32 %v1616, %v1829
    %v1831 = vpop.f32.mrf.mxu0
    %v1832 = vadd.f32 %v1620, %v1831
    %1833 = vmatprep.mubr.bf16.mxu0 0
    %1834 = vmatmul.mubr.bf16.gmra.mxu0 %v1660
    %v1835 = vpop.f32.mrf.mxu0
    %v1836 = vadd.f32 %v1616, %v1835
    %v1837 = vpop.f32.mrf.mxu0
    %v1838 = vadd.f32 %v1620, %v1837
    %v1839 = vpop.f32.mrf.mxu0
    %v1840 = vadd.f32 %v1616, %v1839
    %v1841 = vpop.f32.mrf.mxu0
    %v1842 = vadd.f32 %v1620, %v1841
    %1843 = vmatprep.mubr.bf16.mxu0 0
    %1844 = vmatmul.mubr.bf16.gmra.mxu0 %v1661
    %v1845 = vpop.f32.mrf.mxu0
    %v1846 = vadd.f32 %v1616, %v1845
    %v1847 = vpop.f32.mrf.mxu0
    %v1848 = vadd.f32 %v1620, %v1847
    %v1849 = vpop.f32.mrf.mxu0
    %v1850 = vadd.f32 %v1616, %v1849
    %v1851 = vpop.f32.mrf.mxu0
    %v1852 = vadd.f32 %v1620, %v1851
    %1853 = vmatprep.mubr.bf16.mxu0 0
    %1854 = vmatmul.mubr.bf16.gmra.mxu0 %v1662
    %v1855 = vpop.f32.mrf.mxu0
    %v1856 = vadd.f32 %v1616, %v1855
    %v1857 = vpop.f32.mrf.mxu0
    %v1858 = vadd.f32 %v1620, %v1857
    %v1859 = vpop.f32.mrf.mxu0
    %v1860 = vadd.f32 %v1616, %v1859
    %v1861 = vpop.f32.mrf.mxu0
    %v1862 = vadd.f32 %v1620, %v1861
    %1863 = vdwg.mxu0
    %v1864 = vmax.f32 %v1786, 0.0
    %v1865 = vmax.f32 %v1788, 0.0
    %v1866 = vmax.f32 %v1790, 0.0
    %v1867 = vmax.f32 %v1792, 0.0
    %v1868 = vmax.f32 %v1796, 0.0
    %v1869 = vmax.f32 %v1798, 0.0
    %v1870 = vmax.f32 %v1800, 0.0
    %v1871 = vmax.f32 %v1802, 0.0
    %v1872 = vmax.f32 %v1806, 0.0
    %v1873 = vmax.f32 %v1808, 0.0
    %v1874 = vmax.f32 %v1810, 0.0
    %v1875 = vmax.f32 %v1812, 0.0
    %v1876 = vmax.f32 %v1816, 0.0
    %v1877 = vmax.f32 %v1818, 0.0
    %v1878 = vmax.f32 %v1820, 0.0
    %v1879 = vmax.f32 %v1822, 0.0
    %v1880 = vmax.f32 %v1826, 0.0
    %v1881 = vmax.f32 %v1828, 0.0
    %v1882 = vmax.f32 %v1830, 0.0
    %v1883 = vmax.f32 %v1832, 0.0
    %v1884 = vmax.f32 %v1836, 0.0
    %v1885 = vmax.f32 %v1838, 0.0
    %v1886 = vmax.f32 %v1840, 0.0
    %v1887 = vmax.f32 %v1842, 0.0
    %v1888 = vmax.f32 %v1846, 0.0
    %v1889 = vmax.f32 %v1848, 0.0
    %v1890 = vmax.f32 %v1850, 0.0
    %v1891 = vmax.f32 %v1852, 0.0
    %v1892 = vmax.f32 %v1856, 0.0
    %v1893 = vmax.f32 %v1858, 0.0
    %v1894 = vmax.f32 %v1860, 0.0
    %v1895 = vmax.f32 %v1862, 0.0
    %v1896 = vpack.c.bf16 %v1866, %v1864
    %v1897 = vpack.c.bf16 %v1867, %v1865
    %v1898 = vpack.c.bf16 %v1870, %v1868
    %v1899 = vpack.c.bf16 %v1871, %v1869
    %v1900 = vpack.c.bf16 %v1874, %v1872
    %v1901 = vpack.c.bf16 %v1875, %v1873
    %v1902 = vpack.c.bf16 %v1878, %v1876
    %v1903 = vpack.c.bf16 %v1879, %v1877
    %v1904 = vpack.c.bf16 %v1882, %v1880
    %v1905 = vpack.c.bf16 %v1883, %v1881
    %v1906 = vpack.c.bf16 %v1886, %v1884
    %v1907 = vpack.c.bf16 %v1887, %v1885
    %v1908 = vpack.c.bf16 %v1890, %v1888
    %v1909 = vpack.c.bf16 %v1891, %v1889
    %v1910 = vpack.c.bf16 %v1894, %v1892
    %v1911 = vpack.c.bf16 %v1895, %v1893
    %v1912 = vld [vmem:[%s677] sm:$0xf]
    %v1913 = vld [vmem:[%s677 + $0x4] sm:$0xf]
    %v1914 = vld [vmem:[%s677 + $0x8] sm:$0xf]
    %v1915 = vld [vmem:[%s677 + $0xc] sm:$0xf]
    %v1916 = vld [vmem:[%s677 + $0x10] sm:$0xf]
    %v1917 = vld [vmem:[%s677 + $0x14] sm:$0xf]
    %v1918 = vld [vmem:[%s677 + $0x18] sm:$0xf]
    %v1919 = vld [vmem:[%s677 + $0x1c] sm:$0xf]
    %v1920 = vld [vmem:[%s677 + $0x20] sm:$0xf]
    %v1921 = vld [vmem:[%s677 + $0x24] sm:$0xf]
    %v1922 = vld [vmem:[%s677 + $0x28] sm:$0xf]
    %v1923 = vld [vmem:[%s677 + $0x2c] sm:$0xf]
    %v1924 = vld [vmem:[%s677 + $0x30] sm:$0xf]
    %v1925 = vld [vmem:[%s677 + $0x34] sm:$0xf]
    %v1926 = vld [vmem:[%s677 + $0x38] sm:$0xf]
    %v1927 = vld [vmem:[%s677 + $0x3c] sm:$0xf]
    %v1944 = vunpack.c.l.b16 %v1912
    %v1945 = vunpack.c.l.b16 %v1913
    %v1946 = vunpack.c.l.b16 %v1914
    %v1947 = vunpack.c.l.b16 %v1915
    %v1948 = vunpack.c.l.b16 %v1916
    %v1949 = vunpack.c.l.b16 %v1917
    %v1950 = vunpack.c.l.b16 %v1918
    %v1951 = vunpack.c.l.b16 %v1919
    %v1952 = vunpack.c.l.b16 %v1920
    %v1953 = vunpack.c.l.b16 %v1921
    %v1954 = vunpack.c.l.b16 %v1922
    %v1955 = vunpack.c.l.b16 %v1923
    %v1956 = vunpack.c.l.b16 %v1924
    %v1957 = vunpack.c.l.b16 %v1925
    %v1958 = vunpack.c.l.b16 %v1926
    %v1959 = vunpack.c.l.b16 %v1927
    %v1960 = vpack.c.b16 %v1945, %v1944
    %v1961 = vpack.c.b16 %v1947, %v1946
    %v1962 = vpack.c.b16 %v1949, %v1948
    %v1963 = vpack.c.b16 %v1951, %v1950
    %v1964 = vpack.c.b16 %v1953, %v1952
    %v1965 = vpack.c.b16 %v1955, %v1954
    %v1966 = vpack.c.b16 %v1957, %v1956
    %v1967 = vpack.c.b16 %v1959, %v1958
    %1976 = vmatprep.subr.bf16.mxu0 0
    %1977 = vmatpush1.bf16.msra.mxu0 %v1910
    %1978 = vmatprep.subr.bf16.mxu0 0
    %1979 = vmatpush1.bf16.msra.mxu0 %v1908
    %1980 = vmatprep.subr.bf16.mxu0 0
    %1981 = vmatpush1.bf16.msra.mxu0 %v1906
    %1982 = vmatprep.subr.bf16.mxu0 0
    %1983 = vmatpush1.bf16.msra.mxu0 %v1904
    %1984 = vmatprep.subr.bf16.mxu0 0
    %1985 = vmatpush1.bf16.msra.mxu0 %v1902
    %1986 = vmatprep.subr.bf16.mxu0 0
    %1987 = vmatpush1.bf16.msra.mxu0 %v1900
    %1988 = vmatprep.subr.bf16.mxu0 0
    %1989 = vmatpush1.bf16.msra.mxu0 %v1898
    %1990 = vmatprep.subr.bf16.mxu0 0
    %1991 = vmatpush1.bf16.msra.mxu0 %v1896
    %1992 = vmatprep.subr.bf16.mxu0 0
    %1993 = vmatpush2.bf16.msra.mxu0 0
    %1994 = vmatprep.subr.bf16.mxu0 0
    %1995 = vmatpush2.bf16.msra.mxu0 0
    %1996 = vmatprep.subr.bf16.mxu0 0
    %1997 = vmatpush2.bf16.msra.mxu0 0
    %1998 = vmatprep.subr.bf16.mxu0 0
    %1999 = vmatpush2.bf16.msra.mxu0 0
    %2000 = vmatprep.subr.bf16.mxu0 0
    %2001 = vmatpush2.bf16.msra.mxu0 0
    %2002 = vmatprep.subr.bf16.mxu0 0
    %2003 = vmatpush2.bf16.msra.mxu0 0
    %2004 = vmatprep.subr.bf16.mxu0 0
    %2005 = vmatpush2.bf16.msra.mxu0 0
    %2006 = vmatprep.subr.bf16.mxu0 0
    %2007 = vmatpush2.bf16.msra.mxu0 0
    %2008 = vmatprep.mubr.bf16.mxu0 0
    %2009 = vmatmul.mubr.bf16.gmra.mxu0 %v1960
    %v2010 = vpop.f32.mrf.mxu0
    %v2011 = vadd.f32 0.0, %v2010
    %v2012 = vpop.f32.mrf.mxu0
    %v2013 = vpop.f32.mrf.mxu0
    %v2014 = vadd.f32 0.0, %v2013
    %v2015 = vpop.f32.mrf.mxu0
    %2016 = vmatprep.mubr.bf16.mxu0 0
    %2017 = vmatmul.mubr.bf16.gmra.mxu0 %v1961
    %v2018 = vpop.f32.mrf.mxu0
    %v2019 = vadd.f32 0.0, %v2018
    %v2020 = vpop.f32.mrf.mxu0
    %v2021 = vpop.f32.mrf.mxu0
    %v2022 = vadd.f32 0.0, %v2021
    %v2023 = vpop.f32.mrf.mxu0
    %2024 = vmatprep.mubr.bf16.mxu0 0
    %2025 = vmatmul.mubr.bf16.gmra.mxu0 %v1962
    %v2026 = vpop.f32.mrf.mxu0
    %v2027 = vadd.f32 0.0, %v2026
    %v2028 = vpop.f32.mrf.mxu0
    %v2029 = vpop.f32.mrf.mxu0
    %v2030 = vadd.f32 0.0, %v2029
    %v2031 = vpop.f32.mrf.mxu0
    %2032 = vmatprep.mubr.bf16.mxu0 0
    %2033 = vmatmul.mubr.bf16.gmra.mxu0 %v1963
    %v2034 = vpop.f32.mrf.mxu0
    %v2035 = vadd.f32 0.0, %v2034
    %v2036 = vpop.f32.mrf.mxu0
    %v2037 = vpop.f32.mrf.mxu0
    %v2038 = vadd.f32 0.0, %v2037
    %v2039 = vpop.f32.mrf.mxu0
    %2040 = vmatprep.mubr.bf16.mxu0 0
    %2041 = vmatmul.mubr.bf16.gmra.mxu0 %v1964
    %v2042 = vpop.f32.mrf.mxu0
    %v2043 = vadd.f32 0.0, %v2042
    %v2044 = vpop.f32.mrf.mxu0
    %v2045 = vpop.f32.mrf.mxu0
    %v2046 = vadd.f32 0.0, %v2045
    %v2047 = vpop.f32.mrf.mxu0
    %2048 = vmatprep.mubr.bf16.mxu0 0
    %2049 = vmatmul.mubr.bf16.gmra.mxu0 %v1965
    %v2050 = vpop.f32.mrf.mxu0
    %v2051 = vadd.f32 0.0, %v2050
    %v2052 = vpop.f32.mrf.mxu0
    %v2053 = vpop.f32.mrf.mxu0
    %v2054 = vadd.f32 0.0, %v2053
    %v2055 = vpop.f32.mrf.mxu0
    %2056 = vmatprep.mubr.bf16.mxu0 0
    %2057 = vmatmul.mubr.bf16.gmra.mxu0 %v1966
    %v2058 = vpop.f32.mrf.mxu0
    %v2059 = vadd.f32 0.0, %v2058
    %v2060 = vpop.f32.mrf.mxu0
    %v2061 = vpop.f32.mrf.mxu0
    %v2062 = vadd.f32 0.0, %v2061
    %v2063 = vpop.f32.mrf.mxu0
    %2064 = vmatprep.mubr.bf16.mxu0 0
    %2065 = vmatmul.mubr.bf16.gmra.mxu0 %v1967
    %v2066 = vpop.f32.mrf.mxu0
    %v2067 = vadd.f32 0.0, %v2066
    %v2068 = vpop.f32.mrf.mxu0
    %v2069 = vpop.f32.mrf.mxu0
    %v2070 = vadd.f32 0.0, %v2069
    %v2071 = vpop.f32.mrf.mxu0
    %2072 = vdwg.mxu0
    %v2073 = vld [vmem:[%s839] sm:$0xf]
    %v2074 = vld [vmem:[%s839 + $0x4] sm:$0xf]
    %v2075 = vld [vmem:[%s839 + $0x8] sm:$0xf]
    %v2076 = vld [vmem:[%s839 + $0xc] sm:$0xf]
    %v2077 = vld [vmem:[%s839 + $0x10] sm:$0xf]
    %v2078 = vld [vmem:[%s839 + $0x14] sm:$0xf]
    %v2079 = vld [vmem:[%s839 + $0x18] sm:$0xf]
    %v2080 = vld [vmem:[%s839 + $0x1c] sm:$0xf]
    %v2081 = vld [vmem:[%s839 + $0x20] sm:$0xf]
    %v2082 = vld [vmem:[%s839 + $0x24] sm:$0xf]
    %v2083 = vld [vmem:[%s839 + $0x28] sm:$0xf]
    %v2084 = vld [vmem:[%s839 + $0x2c] sm:$0xf]
    %v2085 = vld [vmem:[%s839 + $0x30] sm:$0xf]
    %v2086 = vld [vmem:[%s839 + $0x34] sm:$0xf]
    %v2087 = vld [vmem:[%s839 + $0x38] sm:$0xf]
    %v2088 = vld [vmem:[%s839 + $0x3c] sm:$0xf]
    %v2105 = vunpack.c.l.b16 %v2073
    %v2106 = vunpack.c.l.b16 %v2074
    %v2107 = vunpack.c.l.b16 %v2075
    %v2108 = vunpack.c.l.b16 %v2076
    %v2109 = vunpack.c.l.b16 %v2077
    %v2110 = vunpack.c.l.b16 %v2078
    %v2111 = vunpack.c.l.b16 %v2079
    %v2112 = vunpack.c.l.b16 %v2080
    %v2113 = vunpack.c.l.b16 %v2081
    %v2114 = vunpack.c.l.b16 %v2082
    %v2115 = vunpack.c.l.b16 %v2083
    %v2116 = vunpack.c.l.b16 %v2084
    %v2117 = vunpack.c.l.b16 %v2085
    %v2118 = vunpack.c.l.b16 %v2086
    %v2119 = vunpack.c.l.b16 %v2087
    %v2120 = vunpack.c.l.b16 %v2088
    %v2121 = vpack.c.b16 %v2106, %v2105
    %v2122 = vpack.c.b16 %v2108, %v2107
    %v2123 = vpack.c.b16 %v2110, %v2109
    %v2124 = vpack.c.b16 %v2112, %v2111
    %v2125 = vpack.c.b16 %v2114, %v2113
    %v2126 = vpack.c.b16 %v2116, %v2115
    %v2127 = vpack.c.b16 %v2118, %v2117
    %v2128 = vpack.c.b16 %v2120, %v2119
    %2137 = vmatprep.subr.bf16.mxu0 0
    %2138 = vmatpush1.bf16.msra.mxu0 %v1911
    %2139 = vmatprep.subr.bf16.mxu0 0
    %2140 = vmatpush1.bf16.msra.mxu0 %v1909
    %2141 = vmatprep.subr.bf16.mxu0 0
    %2142 = vmatpush1.bf16.msra.mxu0 %v1907
    %2143 = vmatprep.subr.bf16.mxu0 0
    %2144 = vmatpush1.bf16.msra.mxu0 %v1905
    %2145 = vmatprep.subr.bf16.mxu0 0
    %2146 = vmatpush1.bf16.msra.mxu0 %v1903
    %2147 = vmatprep.subr.bf16.mxu0 0
    %2148 = vmatpush1.bf16.msra.mxu0 %v1901
    %2149 = vmatprep.subr.bf16.mxu0 0
    %2150 = vmatpush1.bf16.msra.mxu0 %v1899
    %2151 = vmatprep.subr.bf16.mxu0 0
    %2152 = vmatpush1.bf16.msra.mxu0 %v1897
    %2153 = vmatprep.subr.bf16.mxu0 0
    %2154 = vmatpush2.bf16.msra.mxu0 0
    %2155 = vmatprep.subr.bf16.mxu0 0
    %2156 = vmatpush2.bf16.msra.mxu0 0
    %2157 = vmatprep.subr.bf16.mxu0 0
    %2158 = vmatpush2.bf16.msra.mxu0 0
    %2159 = vmatprep.subr.bf16.mxu0 0
    %2160 = vmatpush2.bf16.msra.mxu0 0
    %2161 = vmatprep.subr.bf16.mxu0 0
    %2162 = vmatpush2.bf16.msra.mxu0 0
    %2163 = vmatprep.subr.bf16.mxu0 0
    %2164 = vmatpush2.bf16.msra.mxu0 0
    %2165 = vmatprep.subr.bf16.mxu0 0
    %2166 = vmatpush2.bf16.msra.mxu0 0
    %2167 = vmatprep.subr.bf16.mxu0 0
    %2168 = vmatpush2.bf16.msra.mxu0 0
    %2169 = vmatprep.mubr.bf16.mxu0 0
    %2170 = vmatmul.mubr.bf16.gmra.mxu0 %v2121
    %v2171 = vpop.f32.mrf.mxu0
    %v2172 = vadd.f32 0.0, %v2171
    %v2173 = vpop.f32.mrf.mxu0
    %v2174 = vpop.f32.mrf.mxu0
    %v2175 = vadd.f32 0.0, %v2174
    %v2176 = vpop.f32.mrf.mxu0
    %2177 = vmatprep.mubr.bf16.mxu0 0
    %2178 = vmatmul.mubr.bf16.gmra.mxu0 %v2122
    %v2179 = vpop.f32.mrf.mxu0
    %v2180 = vadd.f32 0.0, %v2179
    %v2181 = vpop.f32.mrf.mxu0
    %v2182 = vpop.f32.mrf.mxu0
    %v2183 = vadd.f32 0.0, %v2182
    %v2184 = vpop.f32.mrf.mxu0
    %2185 = vmatprep.mubr.bf16.mxu0 0
    %2186 = vmatmul.mubr.bf16.gmra.mxu0 %v2123
    %v2187 = vpop.f32.mrf.mxu0
    %v2188 = vadd.f32 0.0, %v2187
    %v2189 = vpop.f32.mrf.mxu0
    %v2190 = vpop.f32.mrf.mxu0
    %v2191 = vadd.f32 0.0, %v2190
    %v2192 = vpop.f32.mrf.mxu0
    %2193 = vmatprep.mubr.bf16.mxu0 0
    %2194 = vmatmul.mubr.bf16.gmra.mxu0 %v2124
    %v2195 = vpop.f32.mrf.mxu0
    %v2196 = vadd.f32 0.0, %v2195
    %v2197 = vpop.f32.mrf.mxu0
    %v2198 = vpop.f32.mrf.mxu0
    %v2199 = vadd.f32 0.0, %v2198
    %v2200 = vpop.f32.mrf.mxu0
    %2201 = vmatprep.mubr.bf16.mxu0 0
    %2202 = vmatmul.mubr.bf16.gmra.mxu0 %v2125
    %v2203 = vpop.f32.mrf.mxu0
    %v2204 = vadd.f32 0.0, %v2203
    %v2205 = vpop.f32.mrf.mxu0
    %v2206 = vpop.f32.mrf.mxu0
    %v2207 = vadd.f32 0.0, %v2206
    %v2208 = vpop.f32.mrf.mxu0
    %2209 = vmatprep.mubr.bf16.mxu0 0
    %2210 = vmatmul.mubr.bf16.gmra.mxu0 %v2126
    %v2211 = vpop.f32.mrf.mxu0
    %v2212 = vadd.f32 0.0, %v2211
    %v2213 = vpop.f32.mrf.mxu0
    %v2214 = vpop.f32.mrf.mxu0
    %v2215 = vadd.f32 0.0, %v2214
    %v2216 = vpop.f32.mrf.mxu0
    %2217 = vmatprep.mubr.bf16.mxu0 0
    %2218 = vmatmul.mubr.bf16.gmra.mxu0 %v2127
    %v2219 = vpop.f32.mrf.mxu0
    %v2220 = vadd.f32 0.0, %v2219
    %v2221 = vpop.f32.mrf.mxu0
    %v2222 = vpop.f32.mrf.mxu0
    %v2223 = vadd.f32 0.0, %v2222
    %v2224 = vpop.f32.mrf.mxu0
    %2225 = vmatprep.mubr.bf16.mxu0 0
    %2226 = vmatmul.mubr.bf16.gmra.mxu0 %v2128
    %v2227 = vpop.f32.mrf.mxu0
    %v2228 = vadd.f32 0.0, %v2227
    %v2229 = vpop.f32.mrf.mxu0
    %v2230 = vpop.f32.mrf.mxu0
    %v2231 = vadd.f32 0.0, %v2230
    %v2232 = vpop.f32.mrf.mxu0
    %2233 = vdwg.mxu0
    %v2250 = vunpack.c.l.b16 %v1562
    %v2251 = vunpack.c.l.b16 %v1563
    %v2252 = vunpack.c.l.b16 %v1564
    %v2253 = vunpack.c.l.b16 %v1565
    %v2254 = vunpack.c.l.b16 %v1566
    %v2255 = vunpack.c.l.b16 %v1567
    %v2256 = vunpack.c.l.b16 %v1568
    %v2257 = vunpack.c.l.b16 %v1569
    %v2258 = vunpack.c.l.b16 %v1570
    %v2259 = vunpack.c.l.b16 %v1571
    %v2260 = vunpack.c.l.b16 %v1572
    %v2261 = vunpack.c.l.b16 %v1573
    %v2262 = vunpack.c.l.b16 %v1574
    %v2263 = vunpack.c.l.b16 %v1575
    %v2264 = vunpack.c.l.b16 %v1576
    %v2265 = vunpack.c.l.b16 %v1577
    %v2266 = vpack.c.b16 %v2251, %v2250
    %v2267 = vpack.c.b16 %v2253, %v2252
    %v2268 = vpack.c.b16 %v2255, %v2254
    %v2269 = vpack.c.b16 %v2257, %v2256
    %v2270 = vpack.c.b16 %v2259, %v2258
    %v2271 = vpack.c.b16 %v2261, %v2260
    %v2272 = vpack.c.b16 %v2263, %v2262
    %v2273 = vpack.c.b16 %v2265, %v2264
    %2282 = vmatprep.subr.bf16.mxu0 0
    %2283 = vmatpush1.bf16.msra.mxu0 %v1561
    %2284 = vmatprep.subr.bf16.mxu0 0
    %2285 = vmatpush1.bf16.msra.mxu0 %v1560
    %2286 = vmatprep.subr.bf16.mxu0 0
    %2287 = vmatpush1.bf16.msra.mxu0 %v1559
    %2288 = vmatprep.subr.bf16.mxu0 0
    %2289 = vmatpush1.bf16.msra.mxu0 %v1558
    %2290 = vmatprep.subr.bf16.mxu0 0
    %2291 = vmatpush1.bf16.msra.mxu0 %v1557
    %2292 = vmatprep.subr.bf16.mxu0 0
    %2293 = vmatpush1.bf16.msra.mxu0 %v1556
    %2294 = vmatprep.subr.bf16.mxu0 0
    %2295 = vmatpush1.bf16.msra.mxu0 %v1555
    %2296 = vmatprep.subr.bf16.mxu0 0
    %2297 = vmatpush1.bf16.msra.mxu0 %v1554
    %2298 = vmatprep.subr.bf16.mxu0 0
    %2299 = vmatpush2.bf16.msra.mxu0 0
    %2300 = vmatprep.subr.bf16.mxu0 0
    %2301 = vmatpush2.bf16.msra.mxu0 0
    %2302 = vmatprep.subr.bf16.mxu0 0
    %2303 = vmatpush2.bf16.msra.mxu0 0
    %2304 = vmatprep.subr.bf16.mxu0 0
    %2305 = vmatpush2.bf16.msra.mxu0 0
    %2306 = vmatprep.subr.bf16.mxu0 0
    %2307 = vmatpush2.bf16.msra.mxu0 0
    %2308 = vmatprep.subr.bf16.mxu0 0
    %2309 = vmatpush2.bf16.msra.mxu0 0
    %2310 = vmatprep.subr.bf16.mxu0 0
    %2311 = vmatpush2.bf16.msra.mxu0 0
    %2312 = vmatprep.subr.bf16.mxu0 0
    %2313 = vmatpush2.bf16.msra.mxu0 0
    %2314 = vmatprep.mubr.bf16.mxu0 0
    %2315 = vmatmul.mubr.bf16.gmra.mxu0 %v2266
    %v2316 = vpop.f32.mrf.mxu0
    %v2317 = vadd.f32 %v2172, %v2316
    %v2318 = vpop.f32.mrf.mxu0
    %v2319 = vpop.f32.mrf.mxu0
    %v2320 = vadd.f32 %v2175, %v2319
    %v2321 = vpop.f32.mrf.mxu0
    %2322 = vmatprep.mubr.bf16.mxu0 0
    %2323 = vmatmul.mubr.bf16.gmra.mxu0 %v2267
    %v2324 = vpop.f32.mrf.mxu0
    %v2325 = vadd.f32 %v2180, %v2324
    %v2326 = vpop.f32.mrf.mxu0
    %v2327 = vpop.f32.mrf.mxu0
    %v2328 = vadd.f32 %v2183, %v2327
    %v2329 = vpop.f32.mrf.mxu0
    %2330 = vmatprep.mubr.bf16.mxu0 0
    %2331 = vmatmul.mubr.bf16.gmra.mxu0 %v2268
    %v2332 = vpop.f32.mrf.mxu0
    %v2333 = vadd.f32 %v2188, %v2332
    %v2334 = vpop.f32.mrf.mxu0
    %v2335 = vpop.f32.mrf.mxu0
    %v2336 = vadd.f32 %v2191, %v2335
    %v2337 = vpop.f32.mrf.mxu0
    %2338 = vmatprep.mubr.bf16.mxu0 0
    %2339 = vmatmul.mubr.bf16.gmra.mxu0 %v2269
    %v2340 = vpop.f32.mrf.mxu0
    %v2341 = vadd.f32 %v2196, %v2340
    %v2342 = vpop.f32.mrf.mxu0
    %v2343 = vpop.f32.mrf.mxu0
    %v2344 = vadd.f32 %v2199, %v2343
    %v2345 = vpop.f32.mrf.mxu0
    %2346 = vmatprep.mubr.bf16.mxu0 0
    %2347 = vmatmul.mubr.bf16.gmra.mxu0 %v2270
    %v2348 = vpop.f32.mrf.mxu0
    %v2349 = vadd.f32 %v2204, %v2348
    %v2350 = vpop.f32.mrf.mxu0
    %v2351 = vpop.f32.mrf.mxu0
    %v2352 = vadd.f32 %v2207, %v2351
    %v2353 = vpop.f32.mrf.mxu0
    %2354 = vmatprep.mubr.bf16.mxu0 0
    %2355 = vmatmul.mubr.bf16.gmra.mxu0 %v2271
    %v2356 = vpop.f32.mrf.mxu0
    %v2357 = vadd.f32 %v2212, %v2356
    %v2358 = vpop.f32.mrf.mxu0
    %v2359 = vpop.f32.mrf.mxu0
    %v2360 = vadd.f32 %v2215, %v2359
    %v2361 = vpop.f32.mrf.mxu0
    %2362 = vmatprep.mubr.bf16.mxu0 0
    %2363 = vmatmul.mubr.bf16.gmra.mxu0 %v2272
    %v2364 = vpop.f32.mrf.mxu0
    %v2365 = vadd.f32 %v2220, %v2364
    %v2366 = vpop.f32.mrf.mxu0
    %v2367 = vpop.f32.mrf.mxu0
    %v2368 = vadd.f32 %v2223, %v2367
    %v2369 = vpop.f32.mrf.mxu0
    %2370 = vmatprep.mubr.bf16.mxu0 0
    %2371 = vmatmul.mubr.bf16.gmra.mxu0 %v2273
    %v2372 = vpop.f32.mrf.mxu0
    %v2373 = vadd.f32 %v2228, %v2372
    %v2374 = vpop.f32.mrf.mxu0
    %v2375 = vpop.f32.mrf.mxu0
    %v2376 = vadd.f32 %v2231, %v2375
    %v2377 = vpop.f32.mrf.mxu0
    %2378 = vdwg.mxu0
    %s2379 = scalar_lea.vmem [#allocation11], 128
    %2380 = vst [vmem:[%s2379] sm:$0xff] %v2317
    %2381 = vst [vmem:[%s2379 + $0x8] sm:$0xff] %v2320
    %2382 = vst [vmem:[%s2379 + $0x10] sm:$0xff] %v2325
    %2383 = vst [vmem:[%s2379 + $0x18] sm:$0xff] %v2328
    %2384 = vst [vmem:[%s2379 + $0x20] sm:$0xff] %v2333
    %2385 = vst [vmem:[%s2379 + $0x28] sm:$0xff] %v2336
    %2386 = vst [vmem:[%s2379 + $0x30] sm:$0xff] %v2341
    %2387 = vst [vmem:[%s2379 + $0x38] sm:$0xff] %v2344
    %2388 = vst [vmem:[%s2379 + $0x40] sm:$0xff] %v2349
    %2389 = vst [vmem:[%s2379 + $0x48] sm:$0xff] %v2352
    %2390 = vst [vmem:[%s2379 + $0x50] sm:$0xff] %v2357
    %2391 = vst [vmem:[%s2379 + $0x58] sm:$0xff] %v2360
    %2392 = vst [vmem:[%s2379 + $0x60] sm:$0xff] %v2365
    %2393 = vst [vmem:[%s2379 + $0x68] sm:$0xff] %v2368
    %2394 = vst [vmem:[%s2379 + $0x70] sm:$0xff] %v2373
    %2395 = vst [vmem:[%s2379 + $0x78] sm:$0xff] %v2376
    %2396 = vst [vmem:[#allocation11] sm:$0xff] %v2011
    %2397 = vst [vmem:[#allocation11 + $0x8] sm:$0xff] %v2014
    %2398 = vst [vmem:[#allocation11 + $0x10] sm:$0xff] %v2019
    %2399 = vst [vmem:[#allocation11 + $0x18] sm:$0xff] %v2022
    %2400 = vst [vmem:[#allocation11 + $0x20] sm:$0xff] %v2027
    %2401 = vst [vmem:[#allocation11 + $0x28] sm:$0xff] %v2030
    %2402 = vst [vmem:[#allocation11 + $0x30] sm:$0xff] %v2035
    %2403 = vst [vmem:[#allocation11 + $0x38] sm:$0xff] %v2038
    %2404 = vst [vmem:[#allocation11 + $0x40] sm:$0xff] %v2043
    %2405 = vst [vmem:[#allocation11 + $0x48] sm:$0xff] %v2046
    %2406 = vst [vmem:[#allocation11 + $0x50] sm:$0xff] %v2051
    %2407 = vst [vmem:[#allocation11 + $0x58] sm:$0xff] %v2054
    %2408 = vst [vmem:[#allocation11 + $0x60] sm:$0xff] %v2059
    %2409 = vst [vmem:[#allocation11 + $0x68] sm:$0xff] %v2062
    %2410 = vst [vmem:[#allocation11 + $0x70] sm:$0xff] %v2067
    %2411 = vst [vmem:[#allocation11 + $0x78] sm:$0xff] %v2070
    // Predicated region
    $region34: #{tpu_custom_call.1} parent=1 // pred_check
      _
    $region35: #{tpu_custom_call.1} parent=1 // pred_check_branch
      %2413 = sbr.rel (0) target = $region37
    $region36: #{tpu_custom_call.1} parent=1 // pred_region
      %s2415 = ssub.s32 4096, 4096
      %2416 = vsyncadd [#allocation5], %s2415
      %s2417 = sshll.u32 [#allocation11], 4
      %s2418 = int_to_ptr.vmem [resolvable:$true] %s2417
      %2423 = dma.vmem_to_hbm [thread:$0]  %s2418, 4096, %s4, [#allocation5], 128, 128, 8
    $region37: #{tpu_custom_call.1} parent=1 // pred_fallthru
      _
    // Predicated region
    $region38: #{tpu_custom_call.1} parent=1 // pred_check
      _
    $region39: #{tpu_custom_call.1} parent=1 // pred_check_branch
      %2425 = sbr.rel (0) target = $region41
    $region40: #{tpu_custom_call.1} parent=1 // pred_region
      %2426 = dma.done [#allocation5], 4096
    $region41: #{tpu_custom_call.1} parent=1 // pred_fallthru
      _
    %2427 = vsyncpa [#allocation4], 1
    %2428 = vsyncpa [#allocation7], 1
    %2429 = vsyncpa [#allocation10], 1
    %2430 = vsyncpa [#allocation5], 1

</llo_original>
